<compile_context>
chip_gen: v6e
topology: v6e:2x2x1
jax: 0.10.0
libtpu: 0.0.40
codegen_flags: <defaults>
</compile_context>

<pallas_src>
import jax
import jax.numpy as jnp
from jax.experimental import pallas as pl
from jax.experimental.pallas import tpu as pltpu


# ----------------------------------------------------------------------------- kernel
def pointgencon_kernel(x_ref,
                       w1_ref, b1_ref,
                       w2_ref, b2_ref,
                       w3_ref, b3_ref,
                       w4_ref, b4_ref,
                       o_ref):
    """x_ref: (C1, TL) in compute dtype.  Weights (Cout, Cin) compute dtype,
    biases (Cout, 1) f32 (BN already folded in).  o_ref: (3, TL) f32."""
    x = x_ref[...]                       # (C1, TL)
    cdt = x.dtype                        # compute dtype for MXU operands

    # conv1 (1x1) [+ folded bn1] + relu
    h = jnp.dot(w1_ref[...], x, preferred_element_type=jnp.float32)
    h = jnp.maximum(h + b1_ref[...], 0.0).astype(cdt)

    # conv2 (1x1) [+ folded bn2] + relu
    h = jnp.dot(w2_ref[...], h, preferred_element_type=jnp.float32)
    h = jnp.maximum(h + b2_ref[...], 0.0).astype(cdt)

    # conv3 (1x1) [+ folded bn3] + relu
    h = jnp.dot(w3_ref[...], h, preferred_element_type=jnp.float32)
    h = jnp.maximum(h + b3_ref[...], 0.0).astype(cdt)

    # conv4 (1x1) + tanh  -> lane-dense (3, TL) store
    h = jnp.dot(w4_ref[...], h, preferred_element_type=jnp.float32)
    o_ref[...] = jnp.tanh(h + b4_ref[...]).astype(o_ref.dtype)


# ----------------------------------------------------------------------------- wrapper
def pointgencon_forward(x_ncl, folded_params, *, tile_l=512,
                        compute_dtype=jnp.bfloat16):
    """x_ncl: (B, C, L) float32 in the native PyTorch Conv1d layout.
    Returns (B, 3, L) float32.  No layout transposes are performed."""
    B, C, L = x_ncl.shape
    w1, b1, w2, b2, w3, b3, w4, b4 = folded_params
    c_out = w4.shape[0]

    # Lane-aligned tile along the point axis; pad L up to a tile multiple.
    tile_l = max(128, min(int(tile_l), pl.cdiv(L, 128) * 128))
    l_pad = pl.cdiv(L, tile_l) * tile_l
    if l_pad != L:
        x_ncl = jnp.pad(x_ncl, ((0, 0), (0, 0), (0, l_pad - L)))

    x_c = x_ncl.astype(compute_dtype)
    ws = [w.astype(compute_dtype) for w in (w1, w2, w3, w4)]
    bs = [b.astype(jnp.float32) for b in (b1, b2, b3, b4)]

    grid = (B, l_pad // tile_l)

    def full_spec(a):
        nd = a.ndim
        return pl.BlockSpec(a.shape, lambda b, l: (0,) * nd)

    in_specs = [pl.BlockSpec((pl.Squeezed(), C, tile_l), lambda b, l: (b, 0, l))]
    for w, bias in zip(ws, bs):
        in_specs.append(full_spec(w))
        in_specs.append(full_spec(bias))

    out_spec = pl.BlockSpec((pl.Squeezed(), c_out, tile_l), lambda b, l: (b, 0, l))

    out = pl.pallas_call(
        pointgencon_kernel,
        out_shape=jax.ShapeDtypeStruct((B, c_out, l_pad), jnp.float32),
        grid_spec=pltpu.PrefetchScalarGridSpec(
            num_scalar_prefetch=0,
            grid=grid,
            in_specs=in_specs,
            out_specs=out_spec,
        ),
        compiler_params=pltpu.CompilerParams(
            dimension_semantics=("parallel", "parallel")),
    )(x_c, ws[0], bs[0], ws[1], bs[1], ws[2], bs[2], ws[3], bs[3])

    return out[:, :, :L] if l_pad != L else out


# ----------------------------------------------------------------------------- params
def make_raw_params(key, bottleneck):
    """Synthetic PyTorch-shaped params: Conv1d weights (Cout, Cin) (kernel size 1
    squeezed) + biases, and BatchNorm1d (gamma, beta, running_mean, running_var)."""
    c1, c2, c3 = bottleneck, bottleneck // 2, bottleneck // 4
    ks = jax.random.split(key, 20)

    def conv(kw, kb, cin, cout):
        w = jax.random.normal(kw, (cout, cin), jnp.float32) * 0.05
        b = jax.random.normal(kb, (cout,), jnp.float32) * 0.1
        return w, b

    def bn(kg, kb, km, kv, c):
        gamma = 1.0 + 0.1 * jax.random.normal(kg, (c,), jnp.float32)
        beta = 0.1 * jax.random.normal(kb, (c,), jnp.float32)
        mean = 0.1 * jax.random.normal(km, (c,), jnp.float32)
        var = jnp.abs(jax.random.normal(kv, (c,), jnp.float32)) * 0.1 + 0.5
        return gamma, beta, mean, var

    w1, b1 = conv(ks[0], ks[1], c1, c1)
    w2, b2 = conv(ks[6], ks[7], c1, c2)
    w3, b3 = conv(ks[12], ks[13], c2, c3)
    w4, b4 = conv(ks[18], ks[19], c3, 3)
    return dict(w1=w1, b1=b1, bn1=bn(ks[2], ks[3], ks[4], ks[5], c1),
                w2=w2, b2=b2, bn2=bn(ks[8], ks[9], ks[10], ks[11], c2),
                w3=w3, b3=b3, bn3=bn(ks[14], ks[15], ks[16], ks[17], c3),
                w4=w4, b4=b4)


def fold_params(raw, eps=1e-5):
    """Fold eval-mode BatchNorm1d + conv bias into the conv weights:
       W' = s * W,  b' = b * s + (beta - mean * s),  s = gamma / sqrt(var + eps)."""
    def fold(w, b, bnp):
        gamma, beta, mean, var = bnp
        s = gamma / jnp.sqrt(var + eps)
        return w * s[:, None], (b * s + beta - mean * s)[:, None]

    w1, b1 = fold(raw["w1"], raw["b1"], raw["bn1"])
    w2, b2 = fold(raw["w2"], raw["b2"], raw["bn2"])
    w3, b3 = fold(raw["w3"], raw["b3"], raw["bn3"])
    return (w1, b1, w2, b2, w3, b3, raw["w4"], raw["b4"][:, None])


# ----------------------------------------------------------------------------- references
def reference_forward_module(x_ncl, raw, eps=1e-5, precision=None):
    """Un-folded Conv1d -> BatchNorm1d(eval) -> ReLU reference (module semantics)."""
    def conv_bn_relu(h, w, b, bnp):
        gamma, beta, mean, var = bnp
        y = jnp.einsum("oc,bcl->bol", w, h, precision=precision) + b[None, :, None]
        s = (gamma / jnp.sqrt(var + eps))[None, :, None]
        y = (y - mean[None, :, None]) * s + beta[None, :, None]
        return jnp.maximum(y, 0.0)

    h = conv_bn_relu(x_ncl, raw["w1"], raw["b1"], raw["bn1"])
    h = conv_bn_relu(h, raw["w2"], raw["b2"], raw["bn2"])
    h = conv_bn_relu(h, raw["w3"], raw["b3"], raw["bn3"])
    y = jnp.einsum("oc,bcl->bol", raw["w4"], h, precision=precision) + raw["b4"][None, :, None]
    return jnp.tanh(y)


def reference_forward_folded(x_ncl, folded, compute_dtype=jnp.float32, precision=None):
    """Pure-JAX reference that mirrors the kernel structure (folded BN, same casts)."""
    w1, b1, w2, b2, w3, b3, w4, b4 = folded

    def mm(w, h):
        return jnp.einsum("oc,bcl->bol",
                          w.astype(compute_dtype), h.astype(compute_dtype),
                          preferred_element_type=jnp.float32, precision=precision)

    h = jnp.maximum(mm(w1, x_ncl) + b1[None], 0.0)
    h = jnp.maximum(mm(w2, h) + b2[None], 0.0)
    h = jnp.maximum(mm(w3, h) + b3[None], 0.0)
    return jnp.tanh(mm(w4, h) + b4[None])


# ----------------------------------------------------------------------------- main
if __name__ == "__main__":
    # Small shapes consistent with the module: bottleneck divisible by 4; pick
    # 256 so channel dims (256/128/64) stay sublane/lane friendly.
    BOTTLENECK = 256
    B, L = 2, 512

    key = jax.random.PRNGKey(0)
    kx, kp = jax.random.split(key)
    x = jax.random.normal(kx, (B, BOTTLENECK, L), jnp.float32)   # PyTorch NCL layout

    raw = make_raw_params(kp, BOTTLENECK)
    folded = fold_params(raw)

    # (a) BN-fold correctness (pure XLA, full precision): folded == module semantics.
    ref_mod = reference_forward_module(x, raw, precision=jax.lax.Precision.HIGHEST)
    ref_fold_hp = reference_forward_folded(x, folded, jnp.float32,
                                           precision=jax.lax.Precision.HIGHEST)
    assert jnp.allclose(ref_fold_hp, ref_mod, atol=1e-4, rtol=1e-4), "BN fold mismatch"

    # (b) f32 Pallas path vs f32 XLA reference with identical structure.
    out_f32 = jax.block_until_ready(
        pointgencon_forward(x, folded, tile_l=512, compute_dtype=jnp.float32))
    ref_f32 = reference_forward_folded(x, folded, jnp.float32)
    assert out_f32.shape == (B, 3, L), out_f32.shape
    assert jnp.allclose(out_f32, ref_f32, atol=1e-3, rtol=1e-3), "f32 kernel mismatch"

    # (c) bf16-operand perf path (default) vs an XLA reference with matching casts.
    out_bf16 = jax.block_until_ready(
        pointgencon_forward(x, folded, tile_l=256, compute_dtype=jnp.bfloat16))
    ref_bf16 = reference_forward_folded(x, folded, jnp.bfloat16)
    assert out_bf16.shape == (B, 3, L), out_bf16.shape
    assert jnp.allclose(out_bf16, ref_bf16, atol=5e-3, rtol=5e-3), "bf16 kernel mismatch"

    print("KERNEL_OK")
</pallas_src>

<mosaic_0001>
module attributes {stable_mosaic.version = 11 : i64} {
  func.func @pointgencon_kernel(%arg0: i32, %arg1: i32, %arg2: memref<1x256x512xf32, #tpu.memory_space<vmem>>, %arg3: memref<256x256xf32, #tpu.memory_space<vmem>>, %arg4: memref<256x1xf32, #tpu.memory_space<vmem>>, %arg5: memref<128x256xf32, #tpu.memory_space<vmem>>, %arg6: memref<128x1xf32, #tpu.memory_space<vmem>>, %arg7: memref<64x128xf32, #tpu.memory_space<vmem>>, %arg8: memref<64x1xf32, #tpu.memory_space<vmem>>, %arg9: memref<3x64xf32, #tpu.memory_space<vmem>>, %arg10: memref<3x1xf32, #tpu.memory_space<vmem>>, %arg11: memref<1x3x512xf32, #tpu.memory_space<vmem>>) attributes {dimension_semantics = [#tpu.dimension_semantics<parallel>, #tpu.dimension_semantics<parallel>], iteration_bounds = array<i64: 2, 1>, scalar_prefetch = 0 : i64, scratch_operands = 0 : i64, tpu.core_type = #tpu.core_type<tc>, window_params = [{transform_indices = @transform_0, window_bounds = array<i64: 1, 256, 512>}, {pipeline_mode = #tpu.pipeline_mode<synchronous>, transform_indices = @transform_1, window_bounds = array<i64: 256, 256>}, {pipeline_mode = #tpu.pipeline_mode<synchronous>, transform_indices = @transform_2, window_bounds = array<i64: 256, 1>}, {pipeline_mode = #tpu.pipeline_mode<synchronous>, transform_indices = @transform_3, window_bounds = array<i64: 128, 256>}, {pipeline_mode = #tpu.pipeline_mode<synchronous>, transform_indices = @transform_4, window_bounds = array<i64: 128, 1>}, {pipeline_mode = #tpu.pipeline_mode<synchronous>, transform_indices = @transform_5, window_bounds = array<i64: 64, 128>}, {pipeline_mode = #tpu.pipeline_mode<synchronous>, transform_indices = @transform_6, window_bounds = array<i64: 64, 1>}, {pipeline_mode = #tpu.pipeline_mode<synchronous>, transform_indices = @transform_7, window_bounds = array<i64: 3, 64>}, {pipeline_mode = #tpu.pipeline_mode<synchronous>, transform_indices = @transform_8, window_bounds = array<i64: 3, 1>}, {transform_indices = @transform_9, window_bounds = array<i64: 1, 3, 512>}]} {
    %c0 = arith.constant 0 : index
    %c0_0 = arith.constant 0 : index
    %c0_1 = arith.constant 0 : index
    %0 = vector.load %arg2[%c0, %c0_0, %c0_1] : memref<1x256x512xf32, #tpu.memory_space<vmem>>, vector<1x256x512xf32>
    %1 = vector.shape_cast %0 : vector<1x256x512xf32> to vector<256x512xf32>
    %c0_2 = arith.constant 0 : index
    %c0_3 = arith.constant 0 : index
    %2 = vector.load %arg3[%c0_2, %c0_3] : memref<256x256xf32, #tpu.memory_space<vmem>>, vector<256x256xf32>
    %cst = arith.constant dense<0.000000e+00> : vector<256x512xf32>
    %3 = tpu.matmul %2, %1, %cst {dimension_numbers = #tpu.dot_dimension_numbers<[1], [0], [0], [1], [0, 0, 1, 1], [], []>} : vector<256x256xf32>, vector<256x512xf32>, vector<256x512xf32> -> vector<256x512xf32>
    %c0_4 = arith.constant 0 : index
    %c0_5 = arith.constant 0 : index
    %4 = vector.load %arg4[%c0_4, %c0_5] : memref<256x1xf32, #tpu.memory_space<vmem>>, vector<256x1xf32>
    %5 = vector.broadcast %4 : vector<256x1xf32> to vector<256x512xf32>
    %6 = arith.addf %3, %5 : vector<256x512xf32>
    %cst_6 = arith.constant 0.000000e+00 : f32
    %7 = vector.broadcast %cst_6 : f32 to vector<256x512xf32>
    %8 = arith.maximumf %6, %7 : vector<256x512xf32>
    %c0_7 = arith.constant 0 : index
    %c0_8 = arith.constant 0 : index
    %9 = vector.load %arg5[%c0_7, %c0_8] : memref<128x256xf32, #tpu.memory_space<vmem>>, vector<128x256xf32>
    %cst_9 = arith.constant dense<0.000000e+00> : vector<128x512xf32>
    %10 = tpu.matmul %9, %8, %cst_9 {dimension_numbers = #tpu.dot_dimension_numbers<[1], [0], [0], [1], [0, 0, 1, 1], [], []>} : vector<128x256xf32>, vector<256x512xf32>, vector<128x512xf32> -> vector<128x512xf32>
    %c0_10 = arith.constant 0 : index
    %c0_11 = arith.constant 0 : index
    %11 = vector.load %arg6[%c0_10, %c0_11] : memref<128x1xf32, #tpu.memory_space<vmem>>, vector<128x1xf32>
    %12 = vector.broadcast %11 : vector<128x1xf32> to vector<128x512xf32>
    %13 = arith.addf %10, %12 : vector<128x512xf32>
    %cst_12 = arith.constant 0.000000e+00 : f32
    %14 = vector.broadcast %cst_12 : f32 to vector<128x512xf32>
    %15 = arith.maximumf %13, %14 : vector<128x512xf32>
    %c0_13 = arith.constant 0 : index
    %c0_14 = arith.constant 0 : index
    %16 = vector.load %arg7[%c0_13, %c0_14] : memref<64x128xf32, #tpu.memory_space<vmem>>, vector<64x128xf32>
    %cst_15 = arith.constant dense<0.000000e+00> : vector<64x512xf32>
    %17 = tpu.matmul %16, %15, %cst_15 {dimension_numbers = #tpu.dot_dimension_numbers<[1], [0], [0], [1], [0, 0, 1, 1], [], []>} : vector<64x128xf32>, vector<128x512xf32>, vector<64x512xf32> -> vector<64x512xf32>
    %c0_16 = arith.constant 0 : index
    %c0_17 = arith.constant 0 : index
    %18 = vector.load %arg8[%c0_16, %c0_17] : memref<64x1xf32, #tpu.memory_space<vmem>>, vector<64x1xf32>
    %19 = vector.broadcast %18 : vector<64x1xf32> to vector<64x512xf32>
    %20 = arith.addf %17, %19 : vector<64x512xf32>
    %cst_18 = arith.constant 0.000000e+00 : f32
    %21 = vector.broadcast %cst_18 : f32 to vector<64x512xf32>
    %22 = arith.maximumf %20, %21 : vector<64x512xf32>
    %c0_19 = arith.constant 0 : index
    %c0_20 = arith.constant 0 : index
    %23 = vector.load %arg9[%c0_19, %c0_20] : memref<3x64xf32, #tpu.memory_space<vmem>>, vector<3x64xf32>
    %cst_21 = arith.constant dense<0.000000e+00> : vector<3x512xf32>
    %24 = tpu.matmul %23, %22, %cst_21 {dimension_numbers = #tpu.dot_dimension_numbers<[1], [0], [0], [1], [0, 0, 1, 1], [], []>} : vector<3x64xf32>, vector<64x512xf32>, vector<3x512xf32> -> vector<3x512xf32>
    %c0_22 = arith.constant 0 : index
    %c0_23 = arith.constant 0 : index
    %25 = vector.load %arg10[%c0_22, %c0_23] : memref<3x1xf32, #tpu.memory_space<vmem>>, vector<3x1xf32>
    %26 = vector.broadcast %25 : vector<3x1xf32> to vector<3x512xf32>
    %27 = arith.addf %24, %26 : vector<3x512xf32>
    %28 = math.tanh %27 : vector<3x512xf32>
    %c0_24 = arith.constant 0 : index
    %c0_25 = arith.constant 0 : index
    %c0_26 = arith.constant 0 : index
    %29 = vector.load %arg11[%c0_24, %c0_25, %c0_26] : memref<1x3x512xf32, #tpu.memory_space<vmem>>, vector<1x3x512xf32>
    %30 = vector.shape_cast %29 : vector<1x3x512xf32> to vector<3x512xf32>
    %31 = vector.shape_cast %28 : vector<3x512xf32> to vector<1x3x512xf32>
    tpu.vector_store %arg11[%c0_24, %c0_25, %c0_26], %31 {strides = array<i32>} : memref<1x3x512xf32, #tpu.memory_space<vmem>>, vector<1x3x512xf32>,
    return
  }
  func.func @transform_0(%arg0: i32, %arg1: i32) -> (i32, i32, i32) {
    %c0_i32 = arith.constant 0 : i32
    %c0_i32_0 = arith.constant 0 : i32
    return %arg0, %c0_i32, %arg1 : i32, i32, i32
  }
  func.func @transform_1(%arg0: i32, %arg1: i32) -> (i32, i32) {
    %c0_i32 = arith.constant 0 : i32
    %c0_i32_0 = arith.constant 0 : i32
    %c0_i32_1 = arith.constant 0 : i32
    return %c0_i32, %c0_i32_0 : i32, i32
  }
  func.func @transform_2(%arg0: i32, %arg1: i32) -> (i32, i32) {
    %c0_i32 = arith.constant 0 : i32
    %c0_i32_0 = arith.constant 0 : i32
    %c0_i32_1 = arith.constant 0 : i32
    return %c0_i32, %c0_i32_0 : i32, i32
  }
  func.func @transform_3(%arg0: i32, %arg1: i32) -> (i32, i32) {
    %c0_i32 = arith.constant 0 : i32
    %c0_i32_0 = arith.constant 0 : i32
    %c0_i32_1 = arith.constant 0 : i32
    return %c0_i32, %c0_i32_0 : i32, i32
  }
  func.func @transform_4(%arg0: i32, %arg1: i32) -> (i32, i32) {
    %c0_i32 = arith.constant 0 : i32
    %c0_i32_0 = arith.constant 0 : i32
    %c0_i32_1 = arith.constant 0 : i32
    return %c0_i32, %c0_i32_0 : i32, i32
  }
  func.func @transform_5(%arg0: i32, %arg1: i32) -> (i32, i32) {
    %c0_i32 = arith.constant 0 : i32
    %c0_i32_0 = arith.constant 0 : i32
    %c0_i32_1 = arith.constant 0 : i32
    return %c0_i32, %c0_i32_0 : i32, i32
  }
  func.func @transform_6(%arg0: i32, %arg1: i32) -> (i32, i32) {
    %c0_i32 = arith.constant 0 : i32
    %c0_i32_0 = arith.constant 0 : i32
    %c0_i32_1 = arith.constant 0 : i32
    return %c0_i32, %c0_i32_0 : i32, i32
  }
  func.func @transform_7(%arg0: i32, %arg1: i32) -> (i32, i32) {
    %c0_i32 = arith.constant 0 : i32
    %c0_i32_0 = arith.constant 0 : i32
    %c0_i32_1 = arith.constant 0 : i32
    return %c0_i32, %c0_i32_0 : i32, i32
  }
  func.func @transform_8(%arg0: i32, %arg1: i32) -> (i32, i32) {
    %c0_i32 = arith.constant 0 : i32
    %c0_i32_0 = arith.constant 0 : i32
    %c0_i32_1 = arith.constant 0 : i32
    return %c0_i32, %c0_i32_0 : i32, i32
  }
  func.func @transform_9(%arg0: i32, %arg1: i32) -> (i32, i32, i32) {
    %c0_i32 = arith.constant 0 : i32
    %c0_i32_0 = arith.constant 0 : i32
    return %arg0, %c0_i32, %arg1 : i32, i32, i32
  }
}

</mosaic_0001>

<llo_original>
// kernel: tpu_custom_call.1
$region0: #{tpu_custom_call.1}
  #allocation0 [shape = 'u32[]', space=smem, size = 0x4, offset = 0x4, fixed_abs, tag = 'smem constant byte address 0x4 - core index']
  #allocation1 [shape = 'u32[144,128]{1,0:T(1,128)}', space=vmem, size = 0x12000, scoped, tag = 'internal scratch']
  %s0 = inlined_call_operand.hbm [shape: f32[2,256,512], index: 0, kind: input, shape index: {}]
  %s1 = inlined_call_operand.hbm [shape: f32[256,256], index: 1, kind: input, shape index: {}]
  %s2 = inlined_call_operand.vmem [shape: f32[256,1], index: 2, kind: input, shape index: {}]
  %s3 = inlined_call_operand.vmem [shape: f32[128,256], index: 3, kind: input, shape index: {}]
  %s4 = inlined_call_operand.vmem [shape: f32[128,1], index: 4, kind: input, shape index: {}]
  %s5 = inlined_call_operand.vmem [shape: f32[64,128], index: 5, kind: input, shape index: {}]
  %s6 = inlined_call_operand.vmem [shape: f32[64,1], index: 6, kind: input, shape index: {}]
  %s7 = inlined_call_operand.vmem [shape: f32[3,64], index: 7, kind: input, shape index: {}]
  %s8 = inlined_call_operand.vmem [shape: f32[3,1], index: 8, kind: input, shape index: {}]
  %s9 = inlined_call_operand.vmem [shape: f32[2,3,512], index: 9, kind: output, shape index: {}]
  %s10 = sld [smem:[#allocation0]]
  $region77: #{tpu_custom_call.1} parent=0
    _
  %s12 = ssub.s32 1, %s10
  %s13 = scalar_select 0, %s12, %s10
  $region1: #{tpu_custom_call.1} parent=0
    #allocation2 [shape = 'u8[1048576]{0}', space=vmem, size = 0x100000, scoped, tag = 'input window, operand 0']
    #allocation3 [shape = 's32[2]{0}', space=sflag, size = 0x8, scoped, tag = 'scoped memory for tpu_custom_call.1']
    #allocation4 [shape = 'u8[262144]{0}', space=vmem, size = 0x40000, scoped, tag = 'input window, operand 1, single buffered']
    #allocation5 [shape = 's32[1]{0}', space=sflag, size = 0x4, scoped, tag = 'scoped memory for tpu_custom_call.1']
    %14 = vsyncpa [#allocation3], 0
    %s15 = scalar_lea.sflag [#allocation3], 1
    %16 = vsyncpa %s15, 0
    %17 = vsyncpa [#allocation5], 0
    loop: start=0, step=1, limit=4
    $region2: #{tpu_custom_call.1} parent=1 // loop_pre_header
      _
    $region3: #{tpu_custom_call.1} parent=1 // loop_header
      %s19 = sphi 0, %s23
      %p20 = scmp.ge.s32.totalorder %s19, 4
      %s26 = sphi 0, %s38
      %s27 = sphi 0, %s34
      %s28 = sphi 0, %s26
      %s29 = sphi 0, %s27
      %s30 = sphi 0, %s28
      %s31 = sphi 0, %s29
      %s43 = sphi 0, %s45
      %s46 = sphi 0, %s43
      %s47 = sphi 0, %s46
      %s63 = sphi 0, %s47
      %s67 = sphi 0, %s67
      %s69 = sphi 0, %s67
      %s70 = sphi 0, %s69
      %s84 = sphi 0, %s70
      %s88 = sphi 0, %s88
      %s90 = sphi 0, %s88
      %s91 = sphi 0, %s90
      %s105 = sphi 0, %s91
      %s109 = sphi 0, %s109
      %s111 = sphi 0, %s109
      %s112 = sphi 0, %s111
      %s126 = sphi 0, %s112
      %s130 = sphi 0, %s130
      %s132 = sphi 0, %s130
      %s133 = sphi 0, %s132
      %s147 = sphi 0, %s133
      %s151 = sphi 0, %s151
      %s153 = sphi 0, %s151
      %s154 = sphi 0, %s153
      %s168 = sphi 0, %s154
      %s172 = sphi 0, %s172
      %s174 = sphi 0, %s172
      %s175 = sphi 0, %s174
      %s189 = sphi 0, %s175
      %s193 = sphi 0, %s193
      %s195 = sphi 0, %s193
      %s196 = sphi 0, %s195
      %s210 = sphi 0, %s196
      %s214 = sphi 0, %s214
      %s216 = sphi 0, %s214
      %s217 = sphi 0, %s216
      %s231 = sphi 0, %s217
      %s239 = sphi 0, %s241
      %s242 = sphi 0, %s239
      %s243 = sphi 0, %s242
      %s259 = sphi 0, %s243
    $region4: #{tpu_custom_call.1} parent=1 // loop_header_branch
      %22 = sbr.rel (%p20) target = $region8
    $region5: #{tpu_custom_call.1} parent=1 // loop_body
      %s24 = ssub.s32 %s19, 1
      %s25 = ssub.s32 %s19, 2
      %s32 = sadd.s32 1, %s27
      %p33 = scmp.ge.s32.totalorder %s32, 1
      %s34 = scalar_select %p33, 0, %s32
      %s35 = sadd.s32 1, %s26
      %s36 = scalar_select %p33, %s35, %s26
      %p37 = scmp.ge.s32.totalorder %s36, 2
      %s38 = scalar_select %p37, 0, %s36
      %s39 = ssub.s32 %s26, %s38
      %s40 = ssub.s32 %s27, %s34
      %s41 = sor.u32 %s39, %s40
      %p42 = scmp.eq.s32.totalorder %s41, 0
      %s44 = sadd.s32 %s43, 1
      %s45 = scalar_select %p42, %s43, %s44
      %p48 = pneg %p42
      %p49 = scmp.eq.s32.totalorder %s19, 1
      %p50 = por %p48, %p49
      %p51 = scmp.ne.s32.totalorder %s43, %s46
      %p52 = scmp.eq.s32.totalorder %s19, 0
      %p53 = por %p51, %p52
      %p54 = scmp.ne.s32.totalorder %s43, %s46
      %p55 = scmp.eq.s32.totalorder %s24, 1
      %p56 = por %p54, %p55
      %p57 = scmp.ne.s32.totalorder %s46, %s47
      %p58 = scmp.eq.s32.totalorder %s24, 0
      %p59 = por %p57, %p58
      %p60 = scmp.ne.s32.totalorder %s46, %s47
      %p61 = scmp.eq.s32.totalorder %s25, 1
      %p62 = por %p60, %p61
      %p64 = scmp.ne.s32.totalorder %s47, %s63
      %p65 = scmp.eq.s32.totalorder %s25, 0
      %p66 = por %p64, %p65
      %s68 = sadd.s32 %s67, 1
      %p71 = scmp.eq.s32.totalorder %s19, 1
      %p72 = scmp.ne.s32.totalorder %s67, %s69
      %p73 = scmp.eq.s32.totalorder %s19, 0
      %p74 = por %p72, %p73
      %p75 = scmp.ne.s32.totalorder %s67, %s69
      %p76 = scmp.eq.s32.totalorder %s24, 1
      %p77 = por %p75, %p76
      %p78 = scmp.ne.s32.totalorder %s69, %s70
      %p79 = scmp.eq.s32.totalorder %s24, 0
      %p80 = por %p78, %p79
      %p81 = scmp.ne.s32.totalorder %s69, %s70
      %p82 = scmp.eq.s32.totalorder %s25, 1
      %p83 = por %p81, %p82
      %p85 = scmp.ne.s32.totalorder %s70, %s84
      %p86 = scmp.eq.s32.totalorder %s25, 0
      %p87 = por %p85, %p86
      %s89 = sadd.s32 %s88, 1
      %p92 = scmp.eq.s32.totalorder %s19, 1
      %p93 = scmp.ne.s32.totalorder %s88, %s90
      %p94 = scmp.eq.s32.totalorder %s19, 0
      %p95 = por %p93, %p94
      %p96 = scmp.ne.s32.totalorder %s88, %s90
      %p97 = scmp.eq.s32.totalorder %s24, 1
      %p98 = por %p96, %p97
      %p99 = scmp.ne.s32.totalorder %s90, %s91
      %p100 = scmp.eq.s32.totalorder %s24, 0
      %p101 = por %p99, %p100
      %p102 = scmp.ne.s32.totalorder %s90, %s91
      %p103 = scmp.eq.s32.totalorder %s25, 1
      %p104 = por %p102, %p103
      %p106 = scmp.ne.s32.totalorder %s91, %s105
      %p107 = scmp.eq.s32.totalorder %s25, 0
      %p108 = por %p106, %p107
      %s110 = sadd.s32 %s109, 1
      %p113 = scmp.eq.s32.totalorder %s19, 1
      %p114 = scmp.ne.s32.totalorder %s109, %s111
      %p115 = scmp.eq.s32.totalorder %s19, 0
      %p116 = por %p114, %p115
      %p117 = scmp.ne.s32.totalorder %s109, %s111
      %p118 = scmp.eq.s32.totalorder %s24, 1
      %p119 = por %p117, %p118
      %p120 = scmp.ne.s32.totalorder %s111, %s112
      %p121 = scmp.eq.s32.totalorder %s24, 0
      %p122 = por %p120, %p121
      %p123 = scmp.ne.s32.totalorder %s111, %s112
      %p124 = scmp.eq.s32.totalorder %s25, 1
      %p125 = por %p123, %p124
      %p127 = scmp.ne.s32.totalorder %s112, %s126
      %p128 = scmp.eq.s32.totalorder %s25, 0
      %p129 = por %p127, %p128
      %s131 = sadd.s32 %s130, 1
      %p134 = scmp.eq.s32.totalorder %s19, 1
      %p135 = scmp.ne.s32.totalorder %s130, %s132
      %p136 = scmp.eq.s32.totalorder %s19, 0
      %p137 = por %p135, %p136
      %p138 = scmp.ne.s32.totalorder %s130, %s132
      %p139 = scmp.eq.s32.totalorder %s24, 1
      %p140 = por %p138, %p139
      %p141 = scmp.ne.s32.totalorder %s132, %s133
      %p142 = scmp.eq.s32.totalorder %s24, 0
      %p143 = por %p141, %p142
      %p144 = scmp.ne.s32.totalorder %s132, %s133
      %p145 = scmp.eq.s32.totalorder %s25, 1
      %p146 = por %p144, %p145
      %p148 = scmp.ne.s32.totalorder %s133, %s147
      %p149 = scmp.eq.s32.totalorder %s25, 0
      %p150 = por %p148, %p149
      %s152 = sadd.s32 %s151, 1
      %p155 = scmp.eq.s32.totalorder %s19, 1
      %p156 = scmp.ne.s32.totalorder %s151, %s153
      %p157 = scmp.eq.s32.totalorder %s19, 0
      %p158 = por %p156, %p157
      %p159 = scmp.ne.s32.totalorder %s151, %s153
      %p160 = scmp.eq.s32.totalorder %s24, 1
      %p161 = por %p159, %p160
      %p162 = scmp.ne.s32.totalorder %s153, %s154
      %p163 = scmp.eq.s32.totalorder %s24, 0
      %p164 = por %p162, %p163
      %p165 = scmp.ne.s32.totalorder %s153, %s154
      %p166 = scmp.eq.s32.totalorder %s25, 1
      %p167 = por %p165, %p166
      %p169 = scmp.ne.s32.totalorder %s154, %s168
      %p170 = scmp.eq.s32.totalorder %s25, 0
      %p171 = por %p169, %p170
      %s173 = sadd.s32 %s172, 1
      %p176 = scmp.eq.s32.totalorder %s19, 1
      %p177 = scmp.ne.s32.totalorder %s172, %s174
      %p178 = scmp.eq.s32.totalorder %s19, 0
      %p179 = por %p177, %p178
      %p180 = scmp.ne.s32.totalorder %s172, %s174
      %p181 = scmp.eq.s32.totalorder %s24, 1
      %p182 = por %p180, %p181
      %p183 = scmp.ne.s32.totalorder %s174, %s175
      %p184 = scmp.eq.s32.totalorder %s24, 0
      %p185 = por %p183, %p184
      %p186 = scmp.ne.s32.totalorder %s174, %s175
      %p187 = scmp.eq.s32.totalorder %s25, 1
      %p188 = por %p186, %p187
      %p190 = scmp.ne.s32.totalorder %s175, %s189
      %p191 = scmp.eq.s32.totalorder %s25, 0
      %p192 = por %p190, %p191
      %s194 = sadd.s32 %s193, 1
      %p197 = scmp.eq.s32.totalorder %s19, 1
      %p198 = scmp.ne.s32.totalorder %s193, %s195
      %p199 = scmp.eq.s32.totalorder %s19, 0
      %p200 = por %p198, %p199
      %p201 = scmp.ne.s32.totalorder %s193, %s195
      %p202 = scmp.eq.s32.totalorder %s24, 1
      %p203 = por %p201, %p202
      %p204 = scmp.ne.s32.totalorder %s195, %s196
      %p205 = scmp.eq.s32.totalorder %s24, 0
      %p206 = por %p204, %p205
      %p207 = scmp.ne.s32.totalorder %s195, %s196
      %p208 = scmp.eq.s32.totalorder %s25, 1
      %p209 = por %p207, %p208
      %p211 = scmp.ne.s32.totalorder %s196, %s210
      %p212 = scmp.eq.s32.totalorder %s25, 0
      %p213 = por %p211, %p212
      %s215 = sadd.s32 %s214, 1
      %p218 = scmp.eq.s32.totalorder %s19, 1
      %p219 = scmp.ne.s32.totalorder %s214, %s216
      %p220 = scmp.eq.s32.totalorder %s19, 0
      %p221 = por %p219, %p220
      %p222 = scmp.ne.s32.totalorder %s214, %s216
      %p223 = scmp.eq.s32.totalorder %s24, 1
      %p224 = por %p222, %p223
      %p225 = scmp.ne.s32.totalorder %s216, %s217
      %p226 = scmp.eq.s32.totalorder %s24, 0
      %p227 = por %p225, %p226
      %p228 = scmp.ne.s32.totalorder %s216, %s217
      %p229 = scmp.eq.s32.totalorder %s25, 1
      %p230 = por %p228, %p229
      %p232 = scmp.ne.s32.totalorder %s217, %s231
      %p233 = scmp.eq.s32.totalorder %s25, 0
      %p234 = por %p232, %p233
      %s235 = ssub.s32 %s26, %s38
      %s236 = ssub.s32 %s27, %s34
      %s237 = sor.u32 %s235, %s236
      %p238 = scmp.eq.s32.totalorder %s237, 0
      %s240 = sadd.s32 %s239, 1
      %s241 = scalar_select %p238, %s239, %s240
      %p244 = pneg %p238
      %p245 = scmp.eq.s32.totalorder %s19, 1
      %p246 = por %p244, %p245
      %p247 = scmp.ne.s32.totalorder %s239, %s242
      %p248 = scmp.eq.s32.totalorder %s19, 0
      %p249 = por %p247, %p248
      %p250 = scmp.ne.s32.totalorder %s239, %s242
      %p251 = scmp.eq.s32.totalorder %s24, 1
      %p252 = por %p250, %p251
      %p253 = scmp.ne.s32.totalorder %s242, %s243
      %p254 = scmp.eq.s32.totalorder %s24, 0
      %p255 = por %p253, %p254
      %p256 = scmp.ne.s32.totalorder %s242, %s243
      %p257 = scmp.eq.s32.totalorder %s25, 1
      %p258 = por %p256, %p257
      %p260 = scmp.ne.s32.totalorder %s243, %s259
      %p261 = scmp.eq.s32.totalorder %s25, 0
      %p262 = por %p260, %p261
      %p263 = scmp.le.s32.totalorder 1, %s19
      %p264 = scmp.lt.s32.totalorder %s19, 3
      %p265 = pnand %p263, %p264
      %p266 = pneg %p265
      // Predicated region
      $region9: #{tpu_custom_call.1} parent=5 // pred_check
        _
      $region10: #{tpu_custom_call.1} parent=5 // pred_check_branch
        %268 = sbr.rel (%p265) target = $region12
      $region11: #{tpu_custom_call.1} parent=5 // pred_region
        %s269 = ssub.s32 %s19, 1
        // Predicated region
        $region13: #{tpu_custom_call.1} parent=11 // pred_check
          %p270 = pneg %p80
        $region14: #{tpu_custom_call.1} parent=11 // pred_check_branch
          %272 = sbr.rel (%p270) target = $region16
        $region15: #{tpu_custom_call.1} parent=11 // pred_region
          %s274 = ssub.s32 8192, 8192
          %275 = vsyncadd [#allocation5], %s274
          %s276 = sshll.u32 [#allocation4], 4
          %s277 = int_to_ptr.vmem [resolvable:$true] %s276
          %282 = dma.hbm_to_vmem [thread:$0]  %s1, 8192, %s277, [#allocation5], 256, 256, 16
        $region16: #{tpu_custom_call.1} parent=11 // pred_fallthru
          _
        // Predicated region
        $region17: #{tpu_custom_call.1} parent=11 // pred_check
          %p283 = pneg %p101
        $region18: #{tpu_custom_call.1} parent=11 // pred_check_branch
          %285 = sbr.rel (%p283) target = $region20
        $region19: #{tpu_custom_call.1} parent=11 // pred_region
          _
        $region20: #{tpu_custom_call.1} parent=11 // pred_fallthru
          _
        // Predicated region
        $region21: #{tpu_custom_call.1} parent=11 // pred_check
          %p286 = pneg %p122
        $region22: #{tpu_custom_call.1} parent=11 // pred_check_branch
          %288 = sbr.rel (%p286) target = $region24
        $region23: #{tpu_custom_call.1} parent=11 // pred_region
          _
        $region24: #{tpu_custom_call.1} parent=11 // pred_fallthru
          _
        // Predicated region
        $region25: #{tpu_custom_call.1} parent=11 // pred_check
          %p289 = pneg %p143
        $region26: #{tpu_custom_call.1} parent=11 // pred_check_branch
          %291 = sbr.rel (%p289) target = $region28
        $region27: #{tpu_custom_call.1} parent=11 // pred_region
          _
        $region28: #{tpu_custom_call.1} parent=11 // pred_fallthru
          _
        // Predicated region
        $region29: #{tpu_custom_call.1} parent=11 // pred_check
          %p292 = pneg %p164
        $region30: #{tpu_custom_call.1} parent=11 // pred_check_branch
          %294 = sbr.rel (%p292) target = $region32
        $region31: #{tpu_custom_call.1} parent=11 // pred_region
          _
        $region32: #{tpu_custom_call.1} parent=11 // pred_fallthru
          _
        // Predicated region
        $region33: #{tpu_custom_call.1} parent=11 // pred_check
          %p295 = pneg %p185
        $region34: #{tpu_custom_call.1} parent=11 // pred_check_branch
          %297 = sbr.rel (%p295) target = $region36
        $region35: #{tpu_custom_call.1} parent=11 // pred_region
          _
        $region36: #{tpu_custom_call.1} parent=11 // pred_fallthru
          _
        // Predicated region
        $region37: #{tpu_custom_call.1} parent=11 // pred_check
          %p298 = pneg %p206
        $region38: #{tpu_custom_call.1} parent=11 // pred_check_branch
          %300 = sbr.rel (%p298) target = $region40
        $region39: #{tpu_custom_call.1} parent=11 // pred_region
          _
        $region40: #{tpu_custom_call.1} parent=11 // pred_fallthru
          _
        // Predicated region
        $region41: #{tpu_custom_call.1} parent=11 // pred_check
          %p301 = pneg %p227
        $region42: #{tpu_custom_call.1} parent=11 // pred_check_branch
          %303 = sbr.rel (%p301) target = $region44
        $region43: #{tpu_custom_call.1} parent=11 // pred_region
          _
        $region44: #{tpu_custom_call.1} parent=11 // pred_fallthru
          _
      $region12: #{tpu_custom_call.1} parent=5 // pred_fallthru
        _
      %p304 = scmp.lt.s32.totalorder %s19, 2
      // Predicated region
      $region45: #{tpu_custom_call.1} parent=5 // pred_check
        %p305 = pneg %p304
      $region46: #{tpu_custom_call.1} parent=5 // pred_check_branch
        %307 = sbr.rel (%p305) target = $region48
      $region47: #{tpu_custom_call.1} parent=5 // pred_region
        // Predicated region
        $region49: #{tpu_custom_call.1} parent=47 // pred_check
          %p308 = pneg %p53
        $region50: #{tpu_custom_call.1} parent=47 // pred_check_branch
          %310 = sbr.rel (%p308) target = $region52
        $region51: #{tpu_custom_call.1} parent=47 // pred_region
          %s311 = sand.u32 %s43, 1
          %s312 = scalar_lea.sflag [#allocation3], %s311
          %s313 = sand.u32 %s43, 1
          %s314 = smul.addr %s313, 1024
          %s315 = scalar_lea.vmem [#allocation2], %s314
          %s316 = smul.u32 4, %s27
          %s318 = ssub.s32 16384, 16384
          %319 = vsyncadd %s312, %s318
          %s320 = smul.addr %s26, 128
          %s321 = sadd.s32 %s316, %s320
          %s322 = smul.addr %s321, 128
          %s323 = scalar_lea.hbm %s0, %s322
          %s324 = sshll.u32 %s315, 4
          %s325 = int_to_ptr.vmem [resolvable:$true] %s324
          %330 = dma.hbm_to_vmem [thread:$0]  %s323, 16384, %s325, %s312, 512, 512, 32
        $region52: #{tpu_custom_call.1} parent=47 // pred_fallthru
          _
      $region48: #{tpu_custom_call.1} parent=5 // pred_fallthru
        _
      %p331 = scmp.le.s32.totalorder 1, %s19
      %p332 = scmp.lt.s32.totalorder %s19, 3
      %p333 = pnand %p331, %p332
      %p334 = pneg %p333
      // Predicated region
      $region53: #{tpu_custom_call.1} parent=5 // pred_check
        _
      $region54: #{tpu_custom_call.1} parent=5 // pred_check_branch
        %336 = sbr.rel (%p333) target = $region56
      $region55: #{tpu_custom_call.1} parent=5 // pred_region
        %s337 = ssub.s32 %s19, 1
        %s338 = sand.u32 %s46, 1
        %s339 = scalar_lea.sflag [#allocation3], %s338
        %s340 = sand.u32 %s46, 1
        %s341 = smul.addr %s340, 1024
        %s342 = scalar_lea.vmem [#allocation2], %s341
        // Predicated region
        $region57: #{tpu_custom_call.1} parent=55 // pred_check
          %p343 = pneg %p59
        $region58: #{tpu_custom_call.1} parent=55 // pred_check_branch
          %345 = sbr.rel (%p343) target = $region60
        $region59: #{tpu_custom_call.1} parent=55 // pred_region
          %346 = dma.done %s339, 16384
        $region60: #{tpu_custom_call.1} parent=55 // pred_fallthru
          _
        // Predicated region
        $region61: #{tpu_custom_call.1} parent=55 // pred_check
          %p347 = pneg %p80
        $region62: #{tpu_custom_call.1} parent=55 // pred_check_branch
          %349 = sbr.rel (%p347) target = $region64
        $region63: #{tpu_custom_call.1} parent=55 // pred_region
          %350 = dma.done [#allocation5], 8192
        $region64: #{tpu_custom_call.1} parent=55 // pred_fallthru
          _
        %s351 = sand.u32 %s46, 1
        %s352 = scalar_lea.sflag [#allocation3], %s351
        %s353 = sand.u32 %s46, 1
        %s354 = smul.addr %s353, 1024
        %s355 = scalar_lea.vmem [#allocation2], %s354
        %p356 = pneg %p59
        %p357 = pneg %p56
        %p358 = pneg %p80
        %p359 = pneg %p77
        %p360 = pneg %p101
        %p361 = pneg %p98
        %p362 = pneg %p122
        %p363 = pneg %p119
        %p364 = pneg %p143
        %p365 = pneg %p140
        %p366 = pneg %p164
        %p367 = pneg %p161
        %p368 = pneg %p185
        %p369 = pneg %p182
        %p370 = pneg %p206
        %p371 = pneg %p203
        %p372 = pneg %p227
        %p373 = pneg %p224
        %p374 = pneg %p255
        %p375 = pneg %p252
        %s376 = smul.u32 4, %s29
        %p377 = scmp.lt.s32.totalorder %s28, 1
        %s378 = scalar_select %p377, %s28, 1
        %p379 = scmp.lt.s32.totalorder %s376, 3
        %s380 = scalar_select %p379, %s376, 3
        %s381 = smul.addr %s378, 4
        %s382 = sadd.s32 %s380, %s381
        %s383 = smul.addr %s382, 4
        %s384 = scalar_lea.vmem %s9, %s383
        %s385 = smul.u32 4, %s29
        %s386 = smul.u32 4, %s29
        %p387 = scmp.lt.s32.totalorder %s28, 1
        %s388 = scalar_select %p387, %s28, 1
        %p389 = scmp.lt.s32.totalorder %s386, 3
        %s390 = scalar_select %p389, %s386, 3
        %s391 = smul.addr %s388, 4
        %s392 = sadd.s32 %s390, %s391
        %s393 = smul.addr %s392, 4
        %s394 = scalar_lea.vmem %s9, %s393
        %s395 = smul.u32 4, %s29
        %v396 = vld [vmem:[%s342] sm:$0xff]
        %v397 = vld [vmem:[%s342 + $0x8] sm:$0xff]
        %v398 = vld [vmem:[%s342 + $0x10] sm:$0xff]
        %v399 = vld [vmem:[%s342 + $0x18] sm:$0xff]
        %v400 = vld [vmem:[%s342 + $0x20] sm:$0xff]
        %v401 = vld [vmem:[%s342 + $0x28] sm:$0xff]
        %v402 = vld [vmem:[%s342 + $0x30] sm:$0xff]
        %v403 = vld [vmem:[%s342 + $0x38] sm:$0xff]
        %v404 = vld [vmem:[%s342 + $0x40] sm:$0xff]
        %v405 = vld [vmem:[%s342 + $0x48] sm:$0xff]
        %v406 = vld [vmem:[%s342 + $0x50] sm:$0xff]
        %v407 = vld [vmem:[%s342 + $0x58] sm:$0xff]
        %v408 = vld [vmem:[%s342 + $0x60] sm:$0xff]
        %v409 = vld [vmem:[%s342 + $0x68] sm:$0xff]
        %v410 = vld [vmem:[%s342 + $0x70] sm:$0xff]
        %v411 = vld [vmem:[%s342 + $0x78] sm:$0xff]
        %v412 = vld [vmem:[%s342 + $0x80] sm:$0xff]
        %v413 = vld [vmem:[%s342 + $0x88] sm:$0xff]
        %v414 = vld [vmem:[%s342 + $0x90] sm:$0xff]
        %v415 = vld [vmem:[%s342 + $0x98] sm:$0xff]
        %v416 = vld [vmem:[%s342 + $0xa0] sm:$0xff]
        %v417 = vld [vmem:[%s342 + $0xa8] sm:$0xff]
        %v418 = vld [vmem:[%s342 + $0xb0] sm:$0xff]
        %v419 = vld [vmem:[%s342 + $0xb8] sm:$0xff]
        %v420 = vld [vmem:[%s342 + $0xc0] sm:$0xff]
        %v421 = vld [vmem:[%s342 + $0xc8] sm:$0xff]
        %v422 = vld [vmem:[%s342 + $0xd0] sm:$0xff]
        %v423 = vld [vmem:[%s342 + $0xd8] sm:$0xff]
        %v424 = vld [vmem:[%s342 + $0xe0] sm:$0xff]
        %v425 = vld [vmem:[%s342 + $0xe8] sm:$0xff]
        %v426 = vld [vmem:[%s342 + $0xf0] sm:$0xff]
        %v427 = vld [vmem:[%s342 + $0xf8] sm:$0xff]
        %v428 = vld [vmem:[%s342 + $0x100] sm:$0xff]
        %v429 = vld [vmem:[%s342 + $0x108] sm:$0xff]
        %v430 = vld [vmem:[%s342 + $0x110] sm:$0xff]
        %v431 = vld [vmem:[%s342 + $0x118] sm:$0xff]
        %v432 = vld [vmem:[%s342 + $0x120] sm:$0xff]
        %v433 = vld [vmem:[%s342 + $0x128] sm:$0xff]
        %v434 = vld [vmem:[%s342 + $0x130] sm:$0xff]
        %v435 = vld [vmem:[%s342 + $0x138] sm:$0xff]
        %v436 = vld [vmem:[%s342 + $0x140] sm:$0xff]
        %v437 = vld [vmem:[%s342 + $0x148] sm:$0xff]
        %v438 = vld [vmem:[%s342 + $0x150] sm:$0xff]
        %v439 = vld [vmem:[%s342 + $0x158] sm:$0xff]
        %v440 = vld [vmem:[%s342 + $0x160] sm:$0xff]
        %v441 = vld [vmem:[%s342 + $0x168] sm:$0xff]
        %v442 = vld [vmem:[%s342 + $0x170] sm:$0xff]
        %v443 = vld [vmem:[%s342 + $0x178] sm:$0xff]
        %v444 = vld [vmem:[%s342 + $0x180] sm:$0xff]
        %v445 = vld [vmem:[%s342 + $0x188] sm:$0xff]
        %v446 = vld [vmem:[%s342 + $0x190] sm:$0xff]
        %v447 = vld [vmem:[%s342 + $0x198] sm:$0xff]
        %v448 = vld [vmem:[%s342 + $0x1a0] sm:$0xff]
        %v449 = vld [vmem:[%s342 + $0x1a8] sm:$0xff]
        %v450 = vld [vmem:[%s342 + $0x1b0] sm:$0xff]
        %v451 = vld [vmem:[%s342 + $0x1b8] sm:$0xff]
        %v452 = vld [vmem:[%s342 + $0x1c0] sm:$0xff]
        %v453 = vld [vmem:[%s342 + $0x1c8] sm:$0xff]
        %v454 = vld [vmem:[%s342 + $0x1d0] sm:$0xff]
        %v455 = vld [vmem:[%s342 + $0x1d8] sm:$0xff]
        %v456 = vld [vmem:[%s342 + $0x1e0] sm:$0xff]
        %v457 = vld [vmem:[%s342 + $0x1e8] sm:$0xff]
        %v458 = vld [vmem:[%s342 + $0x1f0] sm:$0xff]
        %v459 = vld [vmem:[%s342 + $0x1f8] sm:$0xff]
        %v460 = vld [vmem:[%s342 + $0x200] sm:$0xff]
        %v461 = vld [vmem:[%s342 + $0x208] sm:$0xff]
        %v462 = vld [vmem:[%s342 + $0x210] sm:$0xff]
        %v463 = vld [vmem:[%s342 + $0x218] sm:$0xff]
        %v464 = vld [vmem:[%s342 + $0x220] sm:$0xff]
        %v465 = vld [vmem:[%s342 + $0x228] sm:$0xff]
        %v466 = vld [vmem:[%s342 + $0x230] sm:$0xff]
        %v467 = vld [vmem:[%s342 + $0x238] sm:$0xff]
        %v468 = vld [vmem:[%s342 + $0x240] sm:$0xff]
        %v469 = vld [vmem:[%s342 + $0x248] sm:$0xff]
        %v470 = vld [vmem:[%s342 + $0x250] sm:$0xff]
        %v471 = vld [vmem:[%s342 + $0x258] sm:$0xff]
        %v472 = vld [vmem:[%s342 + $0x260] sm:$0xff]
        %v473 = vld [vmem:[%s342 + $0x268] sm:$0xff]
        %v474 = vld [vmem:[%s342 + $0x270] sm:$0xff]
        %v475 = vld [vmem:[%s342 + $0x278] sm:$0xff]
        %v476 = vld [vmem:[%s342 + $0x280] sm:$0xff]
        %v477 = vld [vmem:[%s342 + $0x288] sm:$0xff]
        %v478 = vld [vmem:[%s342 + $0x290] sm:$0xff]
        %v479 = vld [vmem:[%s342 + $0x298] sm:$0xff]
        %v480 = vld [vmem:[%s342 + $0x2a0] sm:$0xff]
        %v481 = vld [vmem:[%s342 + $0x2a8] sm:$0xff]
        %v482 = vld [vmem:[%s342 + $0x2b0] sm:$0xff]
        %v483 = vld [vmem:[%s342 + $0x2b8] sm:$0xff]
        %v484 = vld [vmem:[%s342 + $0x2c0] sm:$0xff]
        %v485 = vld [vmem:[%s342 + $0x2c8] sm:$0xff]
        %v486 = vld [vmem:[%s342 + $0x2d0] sm:$0xff]
        %v487 = vld [vmem:[%s342 + $0x2d8] sm:$0xff]
        %v488 = vld [vmem:[%s342 + $0x2e0] sm:$0xff]
        %v489 = vld [vmem:[%s342 + $0x2e8] sm:$0xff]
        %v490 = vld [vmem:[%s342 + $0x2f0] sm:$0xff]
        %v491 = vld [vmem:[%s342 + $0x2f8] sm:$0xff]
        %v492 = vld [vmem:[%s342 + $0x300] sm:$0xff]
        %v493 = vld [vmem:[%s342 + $0x308] sm:$0xff]
        %v494 = vld [vmem:[%s342 + $0x310] sm:$0xff]
        %v495 = vld [vmem:[%s342 + $0x318] sm:$0xff]
        %v496 = vld [vmem:[%s342 + $0x320] sm:$0xff]
        %v497 = vld [vmem:[%s342 + $0x328] sm:$0xff]
        %v498 = vld [vmem:[%s342 + $0x330] sm:$0xff]
        %v499 = vld [vmem:[%s342 + $0x338] sm:$0xff]
        %v500 = vld [vmem:[%s342 + $0x340] sm:$0xff]
        %v501 = vld [vmem:[%s342 + $0x348] sm:$0xff]
        %v502 = vld [vmem:[%s342 + $0x350] sm:$0xff]
        %v503 = vld [vmem:[%s342 + $0x358] sm:$0xff]
        %v504 = vld [vmem:[%s342 + $0x360] sm:$0xff]
        %v505 = vld [vmem:[%s342 + $0x368] sm:$0xff]
        %v506 = vld [vmem:[%s342 + $0x370] sm:$0xff]
        %v507 = vld [vmem:[%s342 + $0x378] sm:$0xff]
        %v508 = vld [vmem:[%s342 + $0x380] sm:$0xff]
        %v509 = vld [vmem:[%s342 + $0x388] sm:$0xff]
        %v510 = vld [vmem:[%s342 + $0x390] sm:$0xff]
        %v511 = vld [vmem:[%s342 + $0x398] sm:$0xff]
        %v512 = vld [vmem:[%s342 + $0x3a0] sm:$0xff]
        %v513 = vld [vmem:[%s342 + $0x3a8] sm:$0xff]
        %v514 = vld [vmem:[%s342 + $0x3b0] sm:$0xff]
        %v515 = vld [vmem:[%s342 + $0x3b8] sm:$0xff]
        %v516 = vld [vmem:[%s342 + $0x3c0] sm:$0xff]
        %v517 = vld [vmem:[%s342 + $0x3c8] sm:$0xff]
        %v518 = vld [vmem:[%s342 + $0x3d0] sm:$0xff]
        %v519 = vld [vmem:[%s342 + $0x3d8] sm:$0xff]
        %v520 = vld [vmem:[%s342 + $0x3e0] sm:$0xff]
        %v521 = vld [vmem:[%s342 + $0x3e8] sm:$0xff]
        %v522 = vld [vmem:[%s342 + $0x3f0] sm:$0xff]
        %v523 = vld [vmem:[%s342 + $0x3f8] sm:$0xff]
        %v524 = vld [vmem:[#allocation4] sm:$0xff]
        %v525 = vld [vmem:[#allocation4 + $0x8] sm:$0xff]
        %v526 = vld [vmem:[#allocation4 + $0x10] sm:$0xff]
        %v527 = vld [vmem:[#allocation4 + $0x18] sm:$0xff]
        %v528 = vld [vmem:[#allocation4 + $0x20] sm:$0xff]
        %v529 = vld [vmem:[#allocation4 + $0x28] sm:$0xff]
        %v530 = vld [vmem:[#allocation4 + $0x30] sm:$0xff]
        %v531 = vld [vmem:[#allocation4 + $0x38] sm:$0xff]
        %v532 = vld [vmem:[#allocation4 + $0x40] sm:$0xff]
        %v533 = vld [vmem:[#allocation4 + $0x48] sm:$0xff]
        %v534 = vld [vmem:[#allocation4 + $0x50] sm:$0xff]
        %v535 = vld [vmem:[#allocation4 + $0x58] sm:$0xff]
        %v536 = vld [vmem:[#allocation4 + $0x60] sm:$0xff]
        %v537 = vld [vmem:[#allocation4 + $0x68] sm:$0xff]
        %v538 = vld [vmem:[#allocation4 + $0x70] sm:$0xff]
        %v539 = vld [vmem:[#allocation4 + $0x78] sm:$0xff]
        %v540 = vld [vmem:[#allocation4 + $0x80] sm:$0xff]
        %v541 = vld [vmem:[#allocation4 + $0x88] sm:$0xff]
        %v542 = vld [vmem:[#allocation4 + $0x90] sm:$0xff]
        %v543 = vld [vmem:[#allocation4 + $0x98] sm:$0xff]
        %v544 = vld [vmem:[#allocation4 + $0xa0] sm:$0xff]
        %v545 = vld [vmem:[#allocation4 + $0xa8] sm:$0xff]
        %v546 = vld [vmem:[#allocation4 + $0xb0] sm:$0xff]
        %v547 = vld [vmem:[#allocation4 + $0xb8] sm:$0xff]
        %v548 = vld [vmem:[#allocation4 + $0xc0] sm:$0xff]
        %v549 = vld [vmem:[#allocation4 + $0xc8] sm:$0xff]
        %v550 = vld [vmem:[#allocation4 + $0xd0] sm:$0xff]
        %v551 = vld [vmem:[#allocation4 + $0xd8] sm:$0xff]
        %v552 = vld [vmem:[#allocation4 + $0xe0] sm:$0xff]
        %v553 = vld [vmem:[#allocation4 + $0xe8] sm:$0xff]
        %v554 = vld [vmem:[#allocation4 + $0xf0] sm:$0xff]
        %v555 = vld [vmem:[#allocation4 + $0xf8] sm:$0xff]
        %v556 = vld [vmem:[#allocation4 + $0x100] sm:$0xff]
        %v557 = vld [vmem:[#allocation4 + $0x108] sm:$0xff]
        %v558 = vld [vmem:[#allocation4 + $0x110] sm:$0xff]
        %v559 = vld [vmem:[#allocation4 + $0x118] sm:$0xff]
        %v560 = vld [vmem:[#allocation4 + $0x120] sm:$0xff]
        %v561 = vld [vmem:[#allocation4 + $0x128] sm:$0xff]
        %v562 = vld [vmem:[#allocation4 + $0x130] sm:$0xff]
        %v563 = vld [vmem:[#allocation4 + $0x138] sm:$0xff]
        %v564 = vld [vmem:[#allocation4 + $0x140] sm:$0xff]
        %v565 = vld [vmem:[#allocation4 + $0x148] sm:$0xff]
        %v566 = vld [vmem:[#allocation4 + $0x150] sm:$0xff]
        %v567 = vld [vmem:[#allocation4 + $0x158] sm:$0xff]
        %v568 = vld [vmem:[#allocation4 + $0x160] sm:$0xff]
        %v569 = vld [vmem:[#allocation4 + $0x168] sm:$0xff]
        %v570 = vld [vmem:[#allocation4 + $0x170] sm:$0xff]
        %v571 = vld [vmem:[#allocation4 + $0x178] sm:$0xff]
        %v572 = vld [vmem:[#allocation4 + $0x180] sm:$0xff]
        %v573 = vld [vmem:[#allocation4 + $0x188] sm:$0xff]
        %v574 = vld [vmem:[#allocation4 + $0x190] sm:$0xff]
        %v575 = vld [vmem:[#allocation4 + $0x198] sm:$0xff]
        %v576 = vld [vmem:[#allocation4 + $0x1a0] sm:$0xff]
        %v577 = vld [vmem:[#allocation4 + $0x1a8] sm:$0xff]
        %v578 = vld [vmem:[#allocation4 + $0x1b0] sm:$0xff]
        %v579 = vld [vmem:[#allocation4 + $0x1b8] sm:$0xff]
        %v580 = vld [vmem:[#allocation4 + $0x1c0] sm:$0xff]
        %v581 = vld [vmem:[#allocation4 + $0x1c8] sm:$0xff]
        %v582 = vld [vmem:[#allocation4 + $0x1d0] sm:$0xff]
        %v583 = vld [vmem:[#allocation4 + $0x1d8] sm:$0xff]
        %v584 = vld [vmem:[#allocation4 + $0x1e0] sm:$0xff]
        %v585 = vld [vmem:[#allocation4 + $0x1e8] sm:$0xff]
        %v586 = vld [vmem:[#allocation4 + $0x1f0] sm:$0xff]
        %v587 = vld [vmem:[#allocation4 + $0x1f8] sm:$0xff]
        %v588 = vld [vmem:[%s2] sm:$0xff]
        %v589 = vld [vmem:[%s2 + $0x8] sm:$0xff]
        %v590 = vld [vmem:[%s2 + $0x10] sm:$0xff]
        %v591 = vld [vmem:[%s2 + $0x18] sm:$0xff]
        %v592 = vld [vmem:[%s2 + $0x20] sm:$0xff]
        %v593 = vld [vmem:[%s2 + $0x28] sm:$0xff]
        %v594 = vld [vmem:[%s2 + $0x30] sm:$0xff]
        %v595 = vld [vmem:[%s2 + $0x38] sm:$0xff]
        %v596 = vld [vmem:[%s2 + $0x40] sm:$0xff]
        %v597 = vld [vmem:[%s2 + $0x48] sm:$0xff]
        %v598 = vld [vmem:[%s2 + $0x50] sm:$0xff]
        %v599 = vld [vmem:[%s2 + $0x58] sm:$0xff]
        %v600 = vld [vmem:[%s2 + $0x60] sm:$0xff]
        %v601 = vld [vmem:[%s2 + $0x68] sm:$0xff]
        %v602 = vld [vmem:[%s2 + $0x70] sm:$0xff]
        %v603 = vld [vmem:[%s2 + $0x78] sm:$0xff]
        %v604 = vld [vmem:[%s2 + $0x80] sm:$0xff]
        %v605 = vld [vmem:[%s2 + $0x88] sm:$0xff]
        %v606 = vld [vmem:[%s2 + $0x90] sm:$0xff]
        %v607 = vld [vmem:[%s2 + $0x98] sm:$0xff]
        %v608 = vld [vmem:[%s2 + $0xa0] sm:$0xff]
        %v609 = vld [vmem:[%s2 + $0xa8] sm:$0xff]
        %v610 = vld [vmem:[%s2 + $0xb0] sm:$0xff]
        %v611 = vld [vmem:[%s2 + $0xb8] sm:$0xff]
        %v612 = vld [vmem:[%s2 + $0xc0] sm:$0xff]
        %v613 = vld [vmem:[%s2 + $0xc8] sm:$0xff]
        %v614 = vld [vmem:[%s2 + $0xd0] sm:$0xff]
        %v615 = vld [vmem:[%s2 + $0xd8] sm:$0xff]
        %v616 = vld [vmem:[%s2 + $0xe0] sm:$0xff]
        %v617 = vld [vmem:[%s2 + $0xe8] sm:$0xff]
        %v618 = vld [vmem:[%s2 + $0xf0] sm:$0xff]
        %v619 = vld [vmem:[%s2 + $0xf8] sm:$0xff]
        %621 = vset.pattern.permute.xlu0 0
        %622 = vperm.xlu0 %621, %v588
        %v623 = vpop.permute.xlu0 %622
        %626 = vset.pattern.permute.xlu0 0
        %627 = vperm.xlu0 %626, %v589
        %v628 = vpop.permute.xlu0 %627
        %631 = vset.pattern.permute.xlu0 0
        %632 = vperm.xlu0 %631, %v590
        %v633 = vpop.permute.xlu0 %632
        %636 = vset.pattern.permute.xlu0 0
        %637 = vperm.xlu0 %636, %v591
        %v638 = vpop.permute.xlu0 %637
        %641 = vset.pattern.permute.xlu0 0
        %642 = vperm.xlu0 %641, %v592
        %v643 = vpop.permute.xlu0 %642
        %646 = vset.pattern.permute.xlu0 0
        %647 = vperm.xlu0 %646, %v593
        %v648 = vpop.permute.xlu0 %647
        %651 = vset.pattern.permute.xlu0 0
        %652 = vperm.xlu0 %651, %v594
        %v653 = vpop.permute.xlu0 %652
        %656 = vset.pattern.permute.xlu0 0
        %657 = vperm.xlu0 %656, %v595
        %v658 = vpop.permute.xlu0 %657
        %661 = vset.pattern.permute.xlu0 0
        %662 = vperm.xlu0 %661, %v596
        %v663 = vpop.permute.xlu0 %662
        %666 = vset.pattern.permute.xlu0 0
        %667 = vperm.xlu0 %666, %v597
        %v668 = vpop.permute.xlu0 %667
        %671 = vset.pattern.permute.xlu0 0
        %672 = vperm.xlu0 %671, %v598
        %v673 = vpop.permute.xlu0 %672
        %676 = vset.pattern.permute.xlu0 0
        %677 = vperm.xlu0 %676, %v599
        %v678 = vpop.permute.xlu0 %677
        %681 = vset.pattern.permute.xlu0 0
        %682 = vperm.xlu0 %681, %v600
        %v683 = vpop.permute.xlu0 %682
        %686 = vset.pattern.permute.xlu0 0
        %687 = vperm.xlu0 %686, %v601
        %v688 = vpop.permute.xlu0 %687
        %691 = vset.pattern.permute.xlu0 0
        %692 = vperm.xlu0 %691, %v602
        %v693 = vpop.permute.xlu0 %692
        %696 = vset.pattern.permute.xlu0 0
        %697 = vperm.xlu0 %696, %v603
        %v698 = vpop.permute.xlu0 %697
        %701 = vset.pattern.permute.xlu0 0
        %702 = vperm.xlu0 %701, %v604
        %v703 = vpop.permute.xlu0 %702
        %706 = vset.pattern.permute.xlu0 0
        %707 = vperm.xlu0 %706, %v605
        %v708 = vpop.permute.xlu0 %707
        %711 = vset.pattern.permute.xlu0 0
        %712 = vperm.xlu0 %711, %v606
        %v713 = vpop.permute.xlu0 %712
        %716 = vset.pattern.permute.xlu0 0
        %717 = vperm.xlu0 %716, %v607
        %v718 = vpop.permute.xlu0 %717
        %721 = vset.pattern.permute.xlu0 0
        %722 = vperm.xlu0 %721, %v608
        %v723 = vpop.permute.xlu0 %722
        %726 = vset.pattern.permute.xlu0 0
        %727 = vperm.xlu0 %726, %v609
        %v728 = vpop.permute.xlu0 %727
        %731 = vset.pattern.permute.xlu0 0
        %732 = vperm.xlu0 %731, %v610
        %v733 = vpop.permute.xlu0 %732
        %736 = vset.pattern.permute.xlu0 0
        %737 = vperm.xlu0 %736, %v611
        %v738 = vpop.permute.xlu0 %737
        %741 = vset.pattern.permute.xlu0 0
        %742 = vperm.xlu0 %741, %v612
        %v743 = vpop.permute.xlu0 %742
        %746 = vset.pattern.permute.xlu0 0
        %747 = vperm.xlu0 %746, %v613
        %v748 = vpop.permute.xlu0 %747
        %751 = vset.pattern.permute.xlu0 0
        %752 = vperm.xlu0 %751, %v614
        %v753 = vpop.permute.xlu0 %752
        %756 = vset.pattern.permute.xlu0 0
        %757 = vperm.xlu0 %756, %v615
        %v758 = vpop.permute.xlu0 %757
        %761 = vset.pattern.permute.xlu0 0
        %762 = vperm.xlu0 %761, %v616
        %v763 = vpop.permute.xlu0 %762
        %766 = vset.pattern.permute.xlu0 0
        %767 = vperm.xlu0 %766, %v617
        %v768 = vpop.permute.xlu0 %767
        %771 = vset.pattern.permute.xlu0 0
        %772 = vperm.xlu0 %771, %v618
        %v773 = vpop.permute.xlu0 %772
        %776 = vset.pattern.permute.xlu0 0
        %777 = vperm.xlu0 %776, %v619
        %v778 = vpop.permute.xlu0 %777
        %780 = vmatprep.subr.mxu0 %v457
        %781 = vmatpush1.msra.mxu0 %v456
        %782 = vmatprep.subr.mxu0 %v453
        %783 = vmatpush1.msra.mxu0 %v452
        %784 = vmatprep.subr.mxu0 %v449
        %785 = vmatpush1.msra.mxu0 %v448
        %786 = vmatprep.subr.mxu0 %v445
        %787 = vmatpush1.msra.mxu0 %v444
        %788 = vmatprep.subr.mxu0 %v441
        %789 = vmatpush1.msra.mxu0 %v440
        %790 = vmatprep.subr.mxu0 %v437
        %791 = vmatpush1.msra.mxu0 %v436
        %792 = vmatprep.subr.mxu0 %v433
        %793 = vmatpush1.msra.mxu0 %v432
        %794 = vmatprep.subr.mxu0 %v429
        %795 = vmatpush1.msra.mxu0 %v428
        %796 = vmatprep.subr.mxu0 %v425
        %797 = vmatpush1.msra.mxu0 %v424
        %798 = vmatprep.subr.mxu0 %v421
        %799 = vmatpush1.msra.mxu0 %v420
        %800 = vmatprep.subr.mxu0 %v417
        %801 = vmatpush1.msra.mxu0 %v416
        %802 = vmatprep.subr.mxu0 %v413
        %803 = vmatpush1.msra.mxu0 %v412
        %804 = vmatprep.subr.mxu0 %v409
        %805 = vmatpush1.msra.mxu0 %v408
        %806 = vmatprep.subr.mxu0 %v405
        %807 = vmatpush1.msra.mxu0 %v404
        %808 = vmatprep.subr.mxu0 %v401
        %809 = vmatpush1.msra.mxu0 %v400
        %810 = vmatprep.subr.mxu0 %v397
        %811 = vmatpush1.msra.mxu0 %v396
        %812 = vmatprep.subr.mxu0 %v521
        %813 = vmatpush2.msra.mxu0 %v520
        %814 = vmatprep.subr.mxu0 %v517
        %815 = vmatpush2.msra.mxu0 %v516
        %816 = vmatprep.subr.mxu0 %v513
        %817 = vmatpush2.msra.mxu0 %v512
        %818 = vmatprep.subr.mxu0 %v509
        %819 = vmatpush2.msra.mxu0 %v508
        %820 = vmatprep.subr.mxu0 %v505
        %821 = vmatpush2.msra.mxu0 %v504
        %822 = vmatprep.subr.mxu0 %v501
        %823 = vmatpush2.msra.mxu0 %v500
        %824 = vmatprep.subr.mxu0 %v497
        %825 = vmatpush2.msra.mxu0 %v496
        %826 = vmatprep.subr.mxu0 %v493
        %827 = vmatpush2.msra.mxu0 %v492
        %828 = vmatprep.subr.mxu0 %v489
        %829 = vmatpush2.msra.mxu0 %v488
        %830 = vmatprep.subr.mxu0 %v485
        %831 = vmatpush2.msra.mxu0 %v484
        %832 = vmatprep.subr.mxu0 %v481
        %833 = vmatpush2.msra.mxu0 %v480
        %834 = vmatprep.subr.mxu0 %v477
        %835 = vmatpush2.msra.mxu0 %v476
        %836 = vmatprep.subr.mxu0 %v473
        %837 = vmatpush2.msra.mxu0 %v472
        %838 = vmatprep.subr.mxu0 %v469
        %839 = vmatpush2.msra.mxu0 %v468
        %840 = vmatprep.subr.mxu0 %v465
        %841 = vmatpush2.msra.mxu0 %v464
        %842 = vmatprep.subr.mxu0 %v461
        %843 = vmatpush2.msra.mxu0 %v460
        %844 = vmatprep.mubr.f32.mxu0 %v525
        %845 = vmatmul.mubr.f32.gmra.mxu0 %v524
        %v846 = vpop.f32.mrf.mxu0
        %v847 = vadd.f32 %v623, %v846
        %v848 = vpop.f32.mrf.mxu0
        %v849 = vadd.f32 %v623, %v848
        %850 = vmatprep.mubr.f32.mxu0 %v527
        %851 = vmatmul.mubr.f32.gmra.mxu0 %v526
        %v852 = vpop.f32.mrf.mxu0
        %v853 = vadd.f32 %v628, %v852
        %v854 = vpop.f32.mrf.mxu0
        %v855 = vadd.f32 %v628, %v854
        %856 = vmatprep.mubr.f32.mxu0 %v529
        %857 = vmatmul.mubr.f32.gmra.mxu0 %v528
        %v858 = vpop.f32.mrf.mxu0
        %v859 = vadd.f32 %v633, %v858
        %v860 = vpop.f32.mrf.mxu0
        %v861 = vadd.f32 %v633, %v860
        %862 = vmatprep.mubr.f32.mxu0 %v531
        %863 = vmatmul.mubr.f32.gmra.mxu0 %v530
        %v864 = vpop.f32.mrf.mxu0
        %v865 = vadd.f32 %v638, %v864
        %v866 = vpop.f32.mrf.mxu0
        %v867 = vadd.f32 %v638, %v866
        %868 = vmatprep.mubr.f32.mxu0 %v533
        %869 = vmatmul.mubr.f32.gmra.mxu0 %v532
        %v870 = vpop.f32.mrf.mxu0
        %v871 = vadd.f32 %v643, %v870
        %v872 = vpop.f32.mrf.mxu0
        %v873 = vadd.f32 %v643, %v872
        %874 = vmatprep.mubr.f32.mxu0 %v535
        %875 = vmatmul.mubr.f32.gmra.mxu0 %v534
        %v876 = vpop.f32.mrf.mxu0
        %v877 = vadd.f32 %v648, %v876
        %v878 = vpop.f32.mrf.mxu0
        %v879 = vadd.f32 %v648, %v878
        %880 = vmatprep.mubr.f32.mxu0 %v537
        %881 = vmatmul.mubr.f32.gmra.mxu0 %v536
        %v882 = vpop.f32.mrf.mxu0
        %v883 = vadd.f32 %v653, %v882
        %v884 = vpop.f32.mrf.mxu0
        %v885 = vadd.f32 %v653, %v884
        %886 = vmatprep.mubr.f32.mxu0 %v539
        %887 = vmatmul.mubr.f32.gmra.mxu0 %v538
        %v888 = vpop.f32.mrf.mxu0
        %v889 = vadd.f32 %v658, %v888
        %v890 = vpop.f32.mrf.mxu0
        %v891 = vadd.f32 %v658, %v890
        %892 = vmatprep.mubr.f32.mxu0 %v541
        %893 = vmatmul.mubr.f32.gmra.mxu0 %v540
        %v894 = vpop.f32.mrf.mxu0
        %v895 = vadd.f32 %v663, %v894
        %v896 = vpop.f32.mrf.mxu0
        %v897 = vadd.f32 %v663, %v896
        %898 = vmatprep.mubr.f32.mxu0 %v543
        %899 = vmatmul.mubr.f32.gmra.mxu0 %v542
        %v900 = vpop.f32.mrf.mxu0
        %v901 = vadd.f32 %v668, %v900
        %v902 = vpop.f32.mrf.mxu0
        %v903 = vadd.f32 %v668, %v902
        %904 = vmatprep.mubr.f32.mxu0 %v545
        %905 = vmatmul.mubr.f32.gmra.mxu0 %v544
        %v906 = vpop.f32.mrf.mxu0
        %v907 = vadd.f32 %v673, %v906
        %v908 = vpop.f32.mrf.mxu0
        %v909 = vadd.f32 %v673, %v908
        %910 = vmatprep.mubr.f32.mxu0 %v547
        %911 = vmatmul.mubr.f32.gmra.mxu0 %v546
        %v912 = vpop.f32.mrf.mxu0
        %v913 = vadd.f32 %v678, %v912
        %v914 = vpop.f32.mrf.mxu0
        %v915 = vadd.f32 %v678, %v914
        %916 = vmatprep.mubr.f32.mxu0 %v549
        %917 = vmatmul.mubr.f32.gmra.mxu0 %v548
        %v918 = vpop.f32.mrf.mxu0
        %v919 = vadd.f32 %v683, %v918
        %v920 = vpop.f32.mrf.mxu0
        %v921 = vadd.f32 %v683, %v920
        %922 = vmatprep.mubr.f32.mxu0 %v551
        %923 = vmatmul.mubr.f32.gmra.mxu0 %v550
        %v924 = vpop.f32.mrf.mxu0
        %v925 = vadd.f32 %v688, %v924
        %v926 = vpop.f32.mrf.mxu0
        %v927 = vadd.f32 %v688, %v926
        %928 = vmatprep.mubr.f32.mxu0 %v553
        %929 = vmatmul.mubr.f32.gmra.mxu0 %v552
        %v930 = vpop.f32.mrf.mxu0
        %v931 = vadd.f32 %v693, %v930
        %v932 = vpop.f32.mrf.mxu0
        %v933 = vadd.f32 %v693, %v932
        %934 = vmatprep.mubr.f32.mxu0 %v555
        %935 = vmatmul.mubr.f32.gmra.mxu0 %v554
        %v936 = vpop.f32.mrf.mxu0
        %v937 = vadd.f32 %v698, %v936
        %v938 = vpop.f32.mrf.mxu0
        %v939 = vadd.f32 %v698, %v938
        %940 = vmatprep.mubr.f32.mxu0 %v557
        %941 = vmatmul.mubr.f32.gmra.mxu0 %v556
        %v942 = vpop.f32.mrf.mxu0
        %v943 = vadd.f32 %v703, %v942
        %v944 = vpop.f32.mrf.mxu0
        %v945 = vadd.f32 %v703, %v944
        %946 = vmatprep.mubr.f32.mxu0 %v559
        %947 = vmatmul.mubr.f32.gmra.mxu0 %v558
        %v948 = vpop.f32.mrf.mxu0
        %v949 = vadd.f32 %v708, %v948
        %v950 = vpop.f32.mrf.mxu0
        %v951 = vadd.f32 %v708, %v950
        %952 = vmatprep.mubr.f32.mxu0 %v561
        %953 = vmatmul.mubr.f32.gmra.mxu0 %v560
        %v954 = vpop.f32.mrf.mxu0
        %v955 = vadd.f32 %v713, %v954
        %v956 = vpop.f32.mrf.mxu0
        %v957 = vadd.f32 %v713, %v956
        %958 = vmatprep.mubr.f32.mxu0 %v563
        %959 = vmatmul.mubr.f32.gmra.mxu0 %v562
        %v960 = vpop.f32.mrf.mxu0
        %v961 = vadd.f32 %v718, %v960
        %v962 = vpop.f32.mrf.mxu0
        %v963 = vadd.f32 %v718, %v962
        %964 = vmatprep.mubr.f32.mxu0 %v565
        %965 = vmatmul.mubr.f32.gmra.mxu0 %v564
        %v966 = vpop.f32.mrf.mxu0
        %v967 = vadd.f32 %v723, %v966
        %v968 = vpop.f32.mrf.mxu0
        %v969 = vadd.f32 %v723, %v968
        %970 = vmatprep.mubr.f32.mxu0 %v567
        %971 = vmatmul.mubr.f32.gmra.mxu0 %v566
        %v972 = vpop.f32.mrf.mxu0
        %v973 = vadd.f32 %v728, %v972
        %v974 = vpop.f32.mrf.mxu0
        %v975 = vadd.f32 %v728, %v974
        %976 = vmatprep.mubr.f32.mxu0 %v569
        %977 = vmatmul.mubr.f32.gmra.mxu0 %v568
        %v978 = vpop.f32.mrf.mxu0
        %v979 = vadd.f32 %v733, %v978
        %v980 = vpop.f32.mrf.mxu0
        %v981 = vadd.f32 %v733, %v980
        %982 = vmatprep.mubr.f32.mxu0 %v571
        %983 = vmatmul.mubr.f32.gmra.mxu0 %v570
        %v984 = vpop.f32.mrf.mxu0
        %v985 = vadd.f32 %v738, %v984
        %v986 = vpop.f32.mrf.mxu0
        %v987 = vadd.f32 %v738, %v986
        %988 = vmatprep.mubr.f32.mxu0 %v573
        %989 = vmatmul.mubr.f32.gmra.mxu0 %v572
        %v990 = vpop.f32.mrf.mxu0
        %v991 = vadd.f32 %v743, %v990
        %v992 = vpop.f32.mrf.mxu0
        %v993 = vadd.f32 %v743, %v992
        %994 = vmatprep.mubr.f32.mxu0 %v575
        %995 = vmatmul.mubr.f32.gmra.mxu0 %v574
        %v996 = vpop.f32.mrf.mxu0
        %v997 = vadd.f32 %v748, %v996
        %v998 = vpop.f32.mrf.mxu0
        %v999 = vadd.f32 %v748, %v998
        %1000 = vmatprep.mubr.f32.mxu0 %v577
        %1001 = vmatmul.mubr.f32.gmra.mxu0 %v576
        %v1002 = vpop.f32.mrf.mxu0
        %v1003 = vadd.f32 %v753, %v1002
        %v1004 = vpop.f32.mrf.mxu0
        %v1005 = vadd.f32 %v753, %v1004
        %1006 = vmatprep.mubr.f32.mxu0 %v579
        %1007 = vmatmul.mubr.f32.gmra.mxu0 %v578
        %v1008 = vpop.f32.mrf.mxu0
        %v1009 = vadd.f32 %v758, %v1008
        %v1010 = vpop.f32.mrf.mxu0
        %v1011 = vadd.f32 %v758, %v1010
        %1012 = vmatprep.mubr.f32.mxu0 %v581
        %1013 = vmatmul.mubr.f32.gmra.mxu0 %v580
        %v1014 = vpop.f32.mrf.mxu0
        %v1015 = vadd.f32 %v763, %v1014
        %v1016 = vpop.f32.mrf.mxu0
        %v1017 = vadd.f32 %v763, %v1016
        %1018 = vmatprep.mubr.f32.mxu0 %v583
        %1019 = vmatmul.mubr.f32.gmra.mxu0 %v582
        %v1020 = vpop.f32.mrf.mxu0
        %v1021 = vadd.f32 %v768, %v1020
        %v1022 = vpop.f32.mrf.mxu0
        %v1023 = vadd.f32 %v768, %v1022
        %1024 = vmatprep.mubr.f32.mxu0 %v585
        %1025 = vmatmul.mubr.f32.gmra.mxu0 %v584
        %v1026 = vpop.f32.mrf.mxu0
        %v1027 = vadd.f32 %v773, %v1026
        %v1028 = vpop.f32.mrf.mxu0
        %v1029 = vadd.f32 %v773, %v1028
        %1030 = vmatprep.mubr.f32.mxu0 %v587
        %1031 = vmatmul.mubr.f32.gmra.mxu0 %v586
        %v1032 = vpop.f32.mrf.mxu0
        %v1033 = vadd.f32 %v778, %v1032
        %v1034 = vpop.f32.mrf.mxu0
        %v1035 = vadd.f32 %v778, %v1034
        %1036 = vdwg.mxu0
        %1037 = vmatprep.subr.mxu0 %v459
        %1038 = vmatpush1.msra.mxu0 %v458
        %1039 = vmatprep.subr.mxu0 %v455
        %1040 = vmatpush1.msra.mxu0 %v454
        %1041 = vmatprep.subr.mxu0 %v451
        %1042 = vmatpush1.msra.mxu0 %v450
        %1043 = vmatprep.subr.mxu0 %v447
        %1044 = vmatpush1.msra.mxu0 %v446
        %1045 = vmatprep.subr.mxu0 %v443
        %1046 = vmatpush1.msra.mxu0 %v442
        %1047 = vmatprep.subr.mxu0 %v439
        %1048 = vmatpush1.msra.mxu0 %v438
        %1049 = vmatprep.subr.mxu0 %v435
        %1050 = vmatpush1.msra.mxu0 %v434
        %1051 = vmatprep.subr.mxu0 %v431
        %1052 = vmatpush1.msra.mxu0 %v430
        %1053 = vmatprep.subr.mxu0 %v427
        %1054 = vmatpush1.msra.mxu0 %v426
        %1055 = vmatprep.subr.mxu0 %v423
        %1056 = vmatpush1.msra.mxu0 %v422
        %1057 = vmatprep.subr.mxu0 %v419
        %1058 = vmatpush1.msra.mxu0 %v418
        %1059 = vmatprep.subr.mxu0 %v415
        %1060 = vmatpush1.msra.mxu0 %v414
        %1061 = vmatprep.subr.mxu0 %v411
        %1062 = vmatpush1.msra.mxu0 %v410
        %1063 = vmatprep.subr.mxu0 %v407
        %1064 = vmatpush1.msra.mxu0 %v406
        %1065 = vmatprep.subr.mxu0 %v403
        %1066 = vmatpush1.msra.mxu0 %v402
        %1067 = vmatprep.subr.mxu0 %v399
        %1068 = vmatpush1.msra.mxu0 %v398
        %1069 = vmatprep.subr.mxu0 %v523
        %1070 = vmatpush2.msra.mxu0 %v522
        %1071 = vmatprep.subr.mxu0 %v519
        %1072 = vmatpush2.msra.mxu0 %v518
        %1073 = vmatprep.subr.mxu0 %v515
        %1074 = vmatpush2.msra.mxu0 %v514
        %1075 = vmatprep.subr.mxu0 %v511
        %1076 = vmatpush2.msra.mxu0 %v510
        %1077 = vmatprep.subr.mxu0 %v507
        %1078 = vmatpush2.msra.mxu0 %v506
        %1079 = vmatprep.subr.mxu0 %v503
        %1080 = vmatpush2.msra.mxu0 %v502
        %1081 = vmatprep.subr.mxu0 %v499
        %1082 = vmatpush2.msra.mxu0 %v498
        %1083 = vmatprep.subr.mxu0 %v495
        %1084 = vmatpush2.msra.mxu0 %v494
        %1085 = vmatprep.subr.mxu0 %v491
        %1086 = vmatpush2.msra.mxu0 %v490
        %1087 = vmatprep.subr.mxu0 %v487
        %1088 = vmatpush2.msra.mxu0 %v486
        %1089 = vmatprep.subr.mxu0 %v483
        %1090 = vmatpush2.msra.mxu0 %v482
        %1091 = vmatprep.subr.mxu0 %v479
        %1092 = vmatpush2.msra.mxu0 %v478
        %1093 = vmatprep.subr.mxu0 %v475
        %1094 = vmatpush2.msra.mxu0 %v474
        %1095 = vmatprep.subr.mxu0 %v471
        %1096 = vmatpush2.msra.mxu0 %v470
        %1097 = vmatprep.subr.mxu0 %v467
        %1098 = vmatpush2.msra.mxu0 %v466
        %1099 = vmatprep.subr.mxu0 %v463
        %1100 = vmatpush2.msra.mxu0 %v462
        %1101 = vmatprep.mubr.f32.mxu0 %v525
        %1102 = vmatmul.mubr.f32.gmra.mxu0 %v524
        %v1103 = vpop.f32.mrf.mxu0
        %v1104 = vadd.f32 %v623, %v1103
        %v1105 = vpop.f32.mrf.mxu0
        %v1106 = vadd.f32 %v623, %v1105
        %1107 = vmatprep.mubr.f32.mxu0 %v527
        %1108 = vmatmul.mubr.f32.gmra.mxu0 %v526
        %v1109 = vpop.f32.mrf.mxu0
        %v1110 = vadd.f32 %v628, %v1109
        %v1111 = vpop.f32.mrf.mxu0
        %v1112 = vadd.f32 %v628, %v1111
        %1113 = vmatprep.mubr.f32.mxu0 %v529
        %1114 = vmatmul.mubr.f32.gmra.mxu0 %v528
        %v1115 = vpop.f32.mrf.mxu0
        %v1116 = vadd.f32 %v633, %v1115
        %v1117 = vpop.f32.mrf.mxu0
        %v1118 = vadd.f32 %v633, %v1117
        %1119 = vmatprep.mubr.f32.mxu0 %v531
        %1120 = vmatmul.mubr.f32.gmra.mxu0 %v530
        %v1121 = vpop.f32.mrf.mxu0
        %v1122 = vadd.f32 %v638, %v1121
        %v1123 = vpop.f32.mrf.mxu0
        %v1124 = vadd.f32 %v638, %v1123
        %1125 = vmatprep.mubr.f32.mxu0 %v533
        %1126 = vmatmul.mubr.f32.gmra.mxu0 %v532
        %v1127 = vpop.f32.mrf.mxu0
        %v1128 = vadd.f32 %v643, %v1127
        %v1129 = vpop.f32.mrf.mxu0
        %v1130 = vadd.f32 %v643, %v1129
        %1131 = vmatprep.mubr.f32.mxu0 %v535
        %1132 = vmatmul.mubr.f32.gmra.mxu0 %v534
        %v1133 = vpop.f32.mrf.mxu0
        %v1134 = vadd.f32 %v648, %v1133
        %v1135 = vpop.f32.mrf.mxu0
        %v1136 = vadd.f32 %v648, %v1135
        %1137 = vmatprep.mubr.f32.mxu0 %v537
        %1138 = vmatmul.mubr.f32.gmra.mxu0 %v536
        %v1139 = vpop.f32.mrf.mxu0
        %v1140 = vadd.f32 %v653, %v1139
        %v1141 = vpop.f32.mrf.mxu0
        %v1142 = vadd.f32 %v653, %v1141
        %1143 = vmatprep.mubr.f32.mxu0 %v539
        %1144 = vmatmul.mubr.f32.gmra.mxu0 %v538
        %v1145 = vpop.f32.mrf.mxu0
        %v1146 = vadd.f32 %v658, %v1145
        %v1147 = vpop.f32.mrf.mxu0
        %v1148 = vadd.f32 %v658, %v1147
        %1149 = vmatprep.mubr.f32.mxu0 %v541
        %1150 = vmatmul.mubr.f32.gmra.mxu0 %v540
        %v1151 = vpop.f32.mrf.mxu0
        %v1152 = vadd.f32 %v663, %v1151
        %v1153 = vpop.f32.mrf.mxu0
        %v1154 = vadd.f32 %v663, %v1153
        %1155 = vmatprep.mubr.f32.mxu0 %v543
        %1156 = vmatmul.mubr.f32.gmra.mxu0 %v542
        %v1157 = vpop.f32.mrf.mxu0
        %v1158 = vadd.f32 %v668, %v1157
        %v1159 = vpop.f32.mrf.mxu0
        %v1160 = vadd.f32 %v668, %v1159
        %1161 = vmatprep.mubr.f32.mxu0 %v545
        %1162 = vmatmul.mubr.f32.gmra.mxu0 %v544
        %v1163 = vpop.f32.mrf.mxu0
        %v1164 = vadd.f32 %v673, %v1163
        %v1165 = vpop.f32.mrf.mxu0
        %v1166 = vadd.f32 %v673, %v1165
        %1167 = vmatprep.mubr.f32.mxu0 %v547
        %1168 = vmatmul.mubr.f32.gmra.mxu0 %v546
        %v1169 = vpop.f32.mrf.mxu0
        %v1170 = vadd.f32 %v678, %v1169
        %v1171 = vpop.f32.mrf.mxu0
        %v1172 = vadd.f32 %v678, %v1171
        %1173 = vmatprep.mubr.f32.mxu0 %v549
        %1174 = vmatmul.mubr.f32.gmra.mxu0 %v548
        %v1175 = vpop.f32.mrf.mxu0
        %v1176 = vadd.f32 %v683, %v1175
        %v1177 = vpop.f32.mrf.mxu0
        %v1178 = vadd.f32 %v683, %v1177
        %1179 = vmatprep.mubr.f32.mxu0 %v551
        %1180 = vmatmul.mubr.f32.gmra.mxu0 %v550
        %v1181 = vpop.f32.mrf.mxu0
        %v1182 = vadd.f32 %v688, %v1181
        %v1183 = vpop.f32.mrf.mxu0
        %v1184 = vadd.f32 %v688, %v1183
        %1185 = vmatprep.mubr.f32.mxu0 %v553
        %1186 = vmatmul.mubr.f32.gmra.mxu0 %v552
        %v1187 = vpop.f32.mrf.mxu0
        %v1188 = vadd.f32 %v693, %v1187
        %v1189 = vpop.f32.mrf.mxu0
        %v1190 = vadd.f32 %v693, %v1189
        %1191 = vmatprep.mubr.f32.mxu0 %v555
        %1192 = vmatmul.mubr.f32.gmra.mxu0 %v554
        %v1193 = vpop.f32.mrf.mxu0
        %v1194 = vadd.f32 %v698, %v1193
        %v1195 = vpop.f32.mrf.mxu0
        %v1196 = vadd.f32 %v698, %v1195
        %1197 = vmatprep.mubr.f32.mxu0 %v557
        %1198 = vmatmul.mubr.f32.gmra.mxu0 %v556
        %v1199 = vpop.f32.mrf.mxu0
        %v1200 = vadd.f32 %v703, %v1199
        %v1201 = vpop.f32.mrf.mxu0
        %v1202 = vadd.f32 %v703, %v1201
        %1203 = vmatprep.mubr.f32.mxu0 %v559
        %1204 = vmatmul.mubr.f32.gmra.mxu0 %v558
        %v1205 = vpop.f32.mrf.mxu0
        %v1206 = vadd.f32 %v708, %v1205
        %v1207 = vpop.f32.mrf.mxu0
        %v1208 = vadd.f32 %v708, %v1207
        %1209 = vmatprep.mubr.f32.mxu0 %v561
        %1210 = vmatmul.mubr.f32.gmra.mxu0 %v560
        %v1211 = vpop.f32.mrf.mxu0
        %v1212 = vadd.f32 %v713, %v1211
        %v1213 = vpop.f32.mrf.mxu0
        %v1214 = vadd.f32 %v713, %v1213
        %1215 = vmatprep.mubr.f32.mxu0 %v563
        %1216 = vmatmul.mubr.f32.gmra.mxu0 %v562
        %v1217 = vpop.f32.mrf.mxu0
        %v1218 = vadd.f32 %v718, %v1217
        %v1219 = vpop.f32.mrf.mxu0
        %v1220 = vadd.f32 %v718, %v1219
        %1221 = vmatprep.mubr.f32.mxu0 %v565
        %1222 = vmatmul.mubr.f32.gmra.mxu0 %v564
        %v1223 = vpop.f32.mrf.mxu0
        %v1224 = vadd.f32 %v723, %v1223
        %v1225 = vpop.f32.mrf.mxu0
        %v1226 = vadd.f32 %v723, %v1225
        %1227 = vmatprep.mubr.f32.mxu0 %v567
        %1228 = vmatmul.mubr.f32.gmra.mxu0 %v566
        %v1229 = vpop.f32.mrf.mxu0
        %v1230 = vadd.f32 %v728, %v1229
        %v1231 = vpop.f32.mrf.mxu0
        %v1232 = vadd.f32 %v728, %v1231
        %1233 = vmatprep.mubr.f32.mxu0 %v569
        %1234 = vmatmul.mubr.f32.gmra.mxu0 %v568
        %v1235 = vpop.f32.mrf.mxu0
        %v1236 = vadd.f32 %v733, %v1235
        %v1237 = vpop.f32.mrf.mxu0
        %v1238 = vadd.f32 %v733, %v1237
        %1239 = vmatprep.mubr.f32.mxu0 %v571
        %1240 = vmatmul.mubr.f32.gmra.mxu0 %v570
        %v1241 = vpop.f32.mrf.mxu0
        %v1242 = vadd.f32 %v738, %v1241
        %v1243 = vpop.f32.mrf.mxu0
        %v1244 = vadd.f32 %v738, %v1243
        %1245 = vmatprep.mubr.f32.mxu0 %v573
        %1246 = vmatmul.mubr.f32.gmra.mxu0 %v572
        %v1247 = vpop.f32.mrf.mxu0
        %v1248 = vadd.f32 %v743, %v1247
        %v1249 = vpop.f32.mrf.mxu0
        %v1250 = vadd.f32 %v743, %v1249
        %1251 = vmatprep.mubr.f32.mxu0 %v575
        %1252 = vmatmul.mubr.f32.gmra.mxu0 %v574
        %v1253 = vpop.f32.mrf.mxu0
        %v1254 = vadd.f32 %v748, %v1253
        %v1255 = vpop.f32.mrf.mxu0
        %v1256 = vadd.f32 %v748, %v1255
        %1257 = vmatprep.mubr.f32.mxu0 %v577
        %1258 = vmatmul.mubr.f32.gmra.mxu0 %v576
        %v1259 = vpop.f32.mrf.mxu0
        %v1260 = vadd.f32 %v753, %v1259
        %v1261 = vpop.f32.mrf.mxu0
        %v1262 = vadd.f32 %v753, %v1261
        %1263 = vmatprep.mubr.f32.mxu0 %v579
        %1264 = vmatmul.mubr.f32.gmra.mxu0 %v578
        %v1265 = vpop.f32.mrf.mxu0
        %v1266 = vadd.f32 %v758, %v1265
        %v1267 = vpop.f32.mrf.mxu0
        %v1268 = vadd.f32 %v758, %v1267
        %1269 = vmatprep.mubr.f32.mxu0 %v581
        %1270 = vmatmul.mubr.f32.gmra.mxu0 %v580
        %v1271 = vpop.f32.mrf.mxu0
        %v1272 = vadd.f32 %v763, %v1271
        %v1273 = vpop.f32.mrf.mxu0
        %v1274 = vadd.f32 %v763, %v1273
        %1275 = vmatprep.mubr.f32.mxu0 %v583
        %1276 = vmatmul.mubr.f32.gmra.mxu0 %v582
        %v1277 = vpop.f32.mrf.mxu0
        %v1278 = vadd.f32 %v768, %v1277
        %v1279 = vpop.f32.mrf.mxu0
        %v1280 = vadd.f32 %v768, %v1279
        %1281 = vmatprep.mubr.f32.mxu0 %v585
        %1282 = vmatmul.mubr.f32.gmra.mxu0 %v584
        %v1283 = vpop.f32.mrf.mxu0
        %v1284 = vadd.f32 %v773, %v1283
        %v1285 = vpop.f32.mrf.mxu0
        %v1286 = vadd.f32 %v773, %v1285
        %1287 = vmatprep.mubr.f32.mxu0 %v587
        %1288 = vmatmul.mubr.f32.gmra.mxu0 %v586
        %v1289 = vpop.f32.mrf.mxu0
        %v1290 = vadd.f32 %v778, %v1289
        %v1291 = vpop.f32.mrf.mxu0
        %v1292 = vadd.f32 %v778, %v1291
        %1293 = vdwg.mxu0
        %v1294 = vmax.f32 %v847, 0.0
        %v1295 = vmax.f32 %v849, 0.0
        %v1296 = vmax.f32 %v1104, 0.0
        %v1297 = vmax.f32 %v1106, 0.0
        %v1298 = vmax.f32 %v853, 0.0
        %v1299 = vmax.f32 %v855, 0.0
        %v1300 = vmax.f32 %v1110, 0.0
        %v1301 = vmax.f32 %v1112, 0.0
        %v1302 = vmax.f32 %v859, 0.0
        %v1303 = vmax.f32 %v861, 0.0
        %v1304 = vmax.f32 %v1116, 0.0
        %v1305 = vmax.f32 %v1118, 0.0
        %v1306 = vmax.f32 %v865, 0.0
        %v1307 = vmax.f32 %v867, 0.0
        %v1308 = vmax.f32 %v1122, 0.0
        %v1309 = vmax.f32 %v1124, 0.0
        %v1310 = vmax.f32 %v871, 0.0
        %v1311 = vmax.f32 %v873, 0.0
        %v1312 = vmax.f32 %v1128, 0.0
        %v1313 = vmax.f32 %v1130, 0.0
        %v1314 = vmax.f32 %v877, 0.0
        %v1315 = vmax.f32 %v879, 0.0
        %v1316 = vmax.f32 %v1134, 0.0
        %v1317 = vmax.f32 %v1136, 0.0
        %v1318 = vmax.f32 %v883, 0.0
        %v1319 = vmax.f32 %v885, 0.0
        %v1320 = vmax.f32 %v1140, 0.0
        %v1321 = vmax.f32 %v1142, 0.0
        %v1322 = vmax.f32 %v889, 0.0
        %v1323 = vmax.f32 %v891, 0.0
        %v1324 = vmax.f32 %v1146, 0.0
        %v1325 = vmax.f32 %v1148, 0.0
        %v1326 = vmax.f32 %v895, 0.0
        %v1327 = vmax.f32 %v897, 0.0
        %v1328 = vmax.f32 %v1152, 0.0
        %v1329 = vmax.f32 %v1154, 0.0
        %v1330 = vmax.f32 %v901, 0.0
        %v1331 = vmax.f32 %v903, 0.0
        %v1332 = vmax.f32 %v1158, 0.0
        %v1333 = vmax.f32 %v1160, 0.0
        %v1334 = vmax.f32 %v907, 0.0
        %v1335 = vmax.f32 %v909, 0.0
        %v1336 = vmax.f32 %v1164, 0.0
        %v1337 = vmax.f32 %v1166, 0.0
        %v1338 = vmax.f32 %v913, 0.0
        %v1339 = vmax.f32 %v915, 0.0
        %v1340 = vmax.f32 %v1170, 0.0
        %v1341 = vmax.f32 %v1172, 0.0
        %v1342 = vmax.f32 %v919, 0.0
        %v1343 = vmax.f32 %v921, 0.0
        %v1344 = vmax.f32 %v1176, 0.0
        %v1345 = vmax.f32 %v1178, 0.0
        %v1346 = vmax.f32 %v925, 0.0
        %v1347 = vmax.f32 %v927, 0.0
        %v1348 = vmax.f32 %v1182, 0.0
        %v1349 = vmax.f32 %v1184, 0.0
        %v1350 = vmax.f32 %v931, 0.0
        %v1351 = vmax.f32 %v933, 0.0
        %v1352 = vmax.f32 %v1188, 0.0
        %v1353 = vmax.f32 %v1190, 0.0
        %v1354 = vmax.f32 %v937, 0.0
        %v1355 = vmax.f32 %v939, 0.0
        %v1356 = vmax.f32 %v1194, 0.0
        %v1357 = vmax.f32 %v1196, 0.0
        %v1358 = vmax.f32 %v943, 0.0
        %v1359 = vmax.f32 %v945, 0.0
        %v1360 = vmax.f32 %v1200, 0.0
        %v1361 = vmax.f32 %v1202, 0.0
        %v1362 = vmax.f32 %v949, 0.0
        %v1363 = vmax.f32 %v951, 0.0
        %v1364 = vmax.f32 %v1206, 0.0
        %v1365 = vmax.f32 %v1208, 0.0
        %v1366 = vmax.f32 %v955, 0.0
        %v1367 = vmax.f32 %v957, 0.0
        %v1368 = vmax.f32 %v1212, 0.0
        %v1369 = vmax.f32 %v1214, 0.0
        %v1370 = vmax.f32 %v961, 0.0
        %v1371 = vmax.f32 %v963, 0.0
        %v1372 = vmax.f32 %v1218, 0.0
        %v1373 = vmax.f32 %v1220, 0.0
        %v1374 = vmax.f32 %v967, 0.0
        %v1375 = vmax.f32 %v969, 0.0
        %v1376 = vmax.f32 %v1224, 0.0
        %v1377 = vmax.f32 %v1226, 0.0
        %v1378 = vmax.f32 %v973, 0.0
        %v1379 = vmax.f32 %v975, 0.0
        %v1380 = vmax.f32 %v1230, 0.0
        %v1381 = vmax.f32 %v1232, 0.0
        %v1382 = vmax.f32 %v979, 0.0
        %v1383 = vmax.f32 %v981, 0.0
        %v1384 = vmax.f32 %v1236, 0.0
        %v1385 = vmax.f32 %v1238, 0.0
        %v1386 = vmax.f32 %v985, 0.0
        %v1387 = vmax.f32 %v987, 0.0
        %v1388 = vmax.f32 %v1242, 0.0
        %v1389 = vmax.f32 %v1244, 0.0
        %v1390 = vmax.f32 %v991, 0.0
        %v1391 = vmax.f32 %v993, 0.0
        %v1392 = vmax.f32 %v1248, 0.0
        %v1393 = vmax.f32 %v1250, 0.0
        %v1394 = vmax.f32 %v997, 0.0
        %v1395 = vmax.f32 %v999, 0.0
        %v1396 = vmax.f32 %v1254, 0.0
        %v1397 = vmax.f32 %v1256, 0.0
        %v1398 = vmax.f32 %v1003, 0.0
        %v1399 = vmax.f32 %v1005, 0.0
        %v1400 = vmax.f32 %v1260, 0.0
        %v1401 = vmax.f32 %v1262, 0.0
        %v1402 = vmax.f32 %v1009, 0.0
        %v1403 = vmax.f32 %v1011, 0.0
        %v1404 = vmax.f32 %v1266, 0.0
        %v1405 = vmax.f32 %v1268, 0.0
        %v1406 = vmax.f32 %v1015, 0.0
        %v1407 = vmax.f32 %v1017, 0.0
        %v1408 = vmax.f32 %v1272, 0.0
        %v1409 = vmax.f32 %v1274, 0.0
        %v1410 = vmax.f32 %v1021, 0.0
        %v1411 = vmax.f32 %v1023, 0.0
        %v1412 = vmax.f32 %v1278, 0.0
        %v1413 = vmax.f32 %v1280, 0.0
        %v1414 = vmax.f32 %v1027, 0.0
        %v1415 = vmax.f32 %v1029, 0.0
        %v1416 = vmax.f32 %v1284, 0.0
        %v1417 = vmax.f32 %v1286, 0.0
        %v1418 = vmax.f32 %v1033, 0.0
        %v1419 = vmax.f32 %v1035, 0.0
        %v1420 = vmax.f32 %v1290, 0.0
        %v1421 = vmax.f32 %v1292, 0.0
        %v1422 = vld [vmem:[%s3] sm:$0xff]
        %v1423 = vld [vmem:[%s3 + $0x8] sm:$0xff]
        %v1424 = vld [vmem:[%s3 + $0x10] sm:$0xff]
        %v1425 = vld [vmem:[%s3 + $0x18] sm:$0xff]
        %v1426 = vld [vmem:[%s3 + $0x20] sm:$0xff]
        %v1427 = vld [vmem:[%s3 + $0x28] sm:$0xff]
        %v1428 = vld [vmem:[%s3 + $0x30] sm:$0xff]
        %v1429 = vld [vmem:[%s3 + $0x38] sm:$0xff]
        %v1430 = vld [vmem:[%s3 + $0x40] sm:$0xff]
        %v1431 = vld [vmem:[%s3 + $0x48] sm:$0xff]
        %v1432 = vld [vmem:[%s3 + $0x50] sm:$0xff]
        %v1433 = vld [vmem:[%s3 + $0x58] sm:$0xff]
        %v1434 = vld [vmem:[%s3 + $0x60] sm:$0xff]
        %v1435 = vld [vmem:[%s3 + $0x68] sm:$0xff]
        %v1436 = vld [vmem:[%s3 + $0x70] sm:$0xff]
        %v1437 = vld [vmem:[%s3 + $0x78] sm:$0xff]
        %v1438 = vld [vmem:[%s3 + $0x80] sm:$0xff]
        %v1439 = vld [vmem:[%s3 + $0x88] sm:$0xff]
        %v1440 = vld [vmem:[%s3 + $0x90] sm:$0xff]
        %v1441 = vld [vmem:[%s3 + $0x98] sm:$0xff]
        %v1442 = vld [vmem:[%s3 + $0xa0] sm:$0xff]
        %v1443 = vld [vmem:[%s3 + $0xa8] sm:$0xff]
        %v1444 = vld [vmem:[%s3 + $0xb0] sm:$0xff]
        %v1445 = vld [vmem:[%s3 + $0xb8] sm:$0xff]
        %v1446 = vld [vmem:[%s3 + $0xc0] sm:$0xff]
        %v1447 = vld [vmem:[%s3 + $0xc8] sm:$0xff]
        %v1448 = vld [vmem:[%s3 + $0xd0] sm:$0xff]
        %v1449 = vld [vmem:[%s3 + $0xd8] sm:$0xff]
        %v1450 = vld [vmem:[%s3 + $0xe0] sm:$0xff]
        %v1451 = vld [vmem:[%s3 + $0xe8] sm:$0xff]
        %v1452 = vld [vmem:[%s3 + $0xf0] sm:$0xff]
        %v1453 = vld [vmem:[%s3 + $0xf8] sm:$0xff]
        %v1454 = vld [vmem:[%s4] sm:$0xff]
        %v1455 = vld [vmem:[%s4 + $0x8] sm:$0xff]
        %v1456 = vld [vmem:[%s4 + $0x10] sm:$0xff]
        %v1457 = vld [vmem:[%s4 + $0x18] sm:$0xff]
        %v1458 = vld [vmem:[%s4 + $0x20] sm:$0xff]
        %v1459 = vld [vmem:[%s4 + $0x28] sm:$0xff]
        %v1460 = vld [vmem:[%s4 + $0x30] sm:$0xff]
        %v1461 = vld [vmem:[%s4 + $0x38] sm:$0xff]
        %v1462 = vld [vmem:[%s4 + $0x40] sm:$0xff]
        %v1463 = vld [vmem:[%s4 + $0x48] sm:$0xff]
        %v1464 = vld [vmem:[%s4 + $0x50] sm:$0xff]
        %v1465 = vld [vmem:[%s4 + $0x58] sm:$0xff]
        %v1466 = vld [vmem:[%s4 + $0x60] sm:$0xff]
        %v1467 = vld [vmem:[%s4 + $0x68] sm:$0xff]
        %v1468 = vld [vmem:[%s4 + $0x70] sm:$0xff]
        %v1469 = vld [vmem:[%s4 + $0x78] sm:$0xff]
        %1471 = vset.pattern.permute.xlu0 0
        %1472 = vperm.xlu0 %1471, %v1454
        %v1473 = vpop.permute.xlu0 %1472
        %1476 = vset.pattern.permute.xlu0 0
        %1477 = vperm.xlu0 %1476, %v1455
        %v1478 = vpop.permute.xlu0 %1477
        %1481 = vset.pattern.permute.xlu0 0
        %1482 = vperm.xlu0 %1481, %v1456
        %v1483 = vpop.permute.xlu0 %1482
        %1486 = vset.pattern.permute.xlu0 0
        %1487 = vperm.xlu0 %1486, %v1457
        %v1488 = vpop.permute.xlu0 %1487
        %1491 = vset.pattern.permute.xlu0 0
        %1492 = vperm.xlu0 %1491, %v1458
        %v1493 = vpop.permute.xlu0 %1492
        %1496 = vset.pattern.permute.xlu0 0
        %1497 = vperm.xlu0 %1496, %v1459
        %v1498 = vpop.permute.xlu0 %1497
        %1501 = vset.pattern.permute.xlu0 0
        %1502 = vperm.xlu0 %1501, %v1460
        %v1503 = vpop.permute.xlu0 %1502
        %1506 = vset.pattern.permute.xlu0 0
        %1507 = vperm.xlu0 %1506, %v1461
        %v1508 = vpop.permute.xlu0 %1507
        %1511 = vset.pattern.permute.xlu0 0
        %1512 = vperm.xlu0 %1511, %v1462
        %v1513 = vpop.permute.xlu0 %1512
        %1516 = vset.pattern.permute.xlu0 0
        %1517 = vperm.xlu0 %1516, %v1463
        %v1518 = vpop.permute.xlu0 %1517
        %1521 = vset.pattern.permute.xlu0 0
        %1522 = vperm.xlu0 %1521, %v1464
        %v1523 = vpop.permute.xlu0 %1522
        %1526 = vset.pattern.permute.xlu0 0
        %1527 = vperm.xlu0 %1526, %v1465
        %v1528 = vpop.permute.xlu0 %1527
        %1531 = vset.pattern.permute.xlu0 0
        %1532 = vperm.xlu0 %1531, %v1466
        %v1533 = vpop.permute.xlu0 %1532
        %1536 = vset.pattern.permute.xlu0 0
        %1537 = vperm.xlu0 %1536, %v1467
        %v1538 = vpop.permute.xlu0 %1537
        %1541 = vset.pattern.permute.xlu0 0
        %1542 = vperm.xlu0 %1541, %v1468
        %v1543 = vpop.permute.xlu0 %1542
        %1546 = vset.pattern.permute.xlu0 0
        %1547 = vperm.xlu0 %1546, %v1469
        %v1548 = vpop.permute.xlu0 %1547
        %1550 = vmatprep.subr.mxu0 %v1355
        %1551 = vmatpush1.msra.mxu0 %v1354
        %1552 = vmatprep.subr.mxu0 %v1351
        %1553 = vmatpush1.msra.mxu0 %v1350
        %1554 = vmatprep.subr.mxu0 %v1347
        %1555 = vmatpush1.msra.mxu0 %v1346
        %1556 = vmatprep.subr.mxu0 %v1343
        %1557 = vmatpush1.msra.mxu0 %v1342
        %1558 = vmatprep.subr.mxu0 %v1339
        %1559 = vmatpush1.msra.mxu0 %v1338
        %1560 = vmatprep.subr.mxu0 %v1335
        %1561 = vmatpush1.msra.mxu0 %v1334
        %1562 = vmatprep.subr.mxu0 %v1331
        %1563 = vmatpush1.msra.mxu0 %v1330
        %1564 = vmatprep.subr.mxu0 %v1327
        %1565 = vmatpush1.msra.mxu0 %v1326
        %1566 = vmatprep.subr.mxu0 %v1323
        %1567 = vmatpush1.msra.mxu0 %v1322
        %1568 = vmatprep.subr.mxu0 %v1319
        %1569 = vmatpush1.msra.mxu0 %v1318
        %1570 = vmatprep.subr.mxu0 %v1315
        %1571 = vmatpush1.msra.mxu0 %v1314
        %1572 = vmatprep.subr.mxu0 %v1311
        %1573 = vmatpush1.msra.mxu0 %v1310
        %1574 = vmatprep.subr.mxu0 %v1307
        %1575 = vmatpush1.msra.mxu0 %v1306
        %1576 = vmatprep.subr.mxu0 %v1303
        %1577 = vmatpush1.msra.mxu0 %v1302
        %1578 = vmatprep.subr.mxu0 %v1299
        %1579 = vmatpush1.msra.mxu0 %v1298
        %1580 = vmatprep.subr.mxu0 %v1295
        %1581 = vmatpush1.msra.mxu0 %v1294
        %1582 = vmatprep.subr.mxu0 %v1419
        %1583 = vmatpush2.msra.mxu0 %v1418
        %1584 = vmatprep.subr.mxu0 %v1415
        %1585 = vmatpush2.msra.mxu0 %v1414
        %1586 = vmatprep.subr.mxu0 %v1411
        %1587 = vmatpush2.msra.mxu0 %v1410
        %1588 = vmatprep.subr.mxu0 %v1407
        %1589 = vmatpush2.msra.mxu0 %v1406
        %1590 = vmatprep.subr.mxu0 %v1403
        %1591 = vmatpush2.msra.mxu0 %v1402
        %1592 = vmatprep.subr.mxu0 %v1399
        %1593 = vmatpush2.msra.mxu0 %v1398
        %1594 = vmatprep.subr.mxu0 %v1395
        %1595 = vmatpush2.msra.mxu0 %v1394
        %1596 = vmatprep.subr.mxu0 %v1391
        %1597 = vmatpush2.msra.mxu0 %v1390
        %1598 = vmatprep.subr.mxu0 %v1387
        %1599 = vmatpush2.msra.mxu0 %v1386
        %1600 = vmatprep.subr.mxu0 %v1383
        %1601 = vmatpush2.msra.mxu0 %v1382
        %1602 = vmatprep.subr.mxu0 %v1379
        %1603 = vmatpush2.msra.mxu0 %v1378
        %1604 = vmatprep.subr.mxu0 %v1375
        %1605 = vmatpush2.msra.mxu0 %v1374
        %1606 = vmatprep.subr.mxu0 %v1371
        %1607 = vmatpush2.msra.mxu0 %v1370
        %1608 = vmatprep.subr.mxu0 %v1367
        %1609 = vmatpush2.msra.mxu0 %v1366
        %1610 = vmatprep.subr.mxu0 %v1363
        %1611 = vmatpush2.msra.mxu0 %v1362
        %1612 = vmatprep.subr.mxu0 %v1359
        %1613 = vmatpush2.msra.mxu0 %v1358
        %1614 = vmatprep.mubr.f32.mxu0 %v1423
        %1615 = vmatmul.mubr.f32.gmra.mxu0 %v1422
        %v1616 = vpop.f32.mrf.mxu0
        %v1617 = vadd.f32 %v1473, %v1616
        %v1618 = vpop.f32.mrf.mxu0
        %v1619 = vadd.f32 %v1473, %v1618
        %1620 = vmatprep.mubr.f32.mxu0 %v1425
        %1621 = vmatmul.mubr.f32.gmra.mxu0 %v1424
        %v1622 = vpop.f32.mrf.mxu0
        %v1623 = vadd.f32 %v1478, %v1622
        %v1624 = vpop.f32.mrf.mxu0
        %v1625 = vadd.f32 %v1478, %v1624
        %1626 = vmatprep.mubr.f32.mxu0 %v1427
        %1627 = vmatmul.mubr.f32.gmra.mxu0 %v1426
        %v1628 = vpop.f32.mrf.mxu0
        %v1629 = vadd.f32 %v1483, %v1628
        %v1630 = vpop.f32.mrf.mxu0
        %v1631 = vadd.f32 %v1483, %v1630
        %1632 = vmatprep.mubr.f32.mxu0 %v1429
        %1633 = vmatmul.mubr.f32.gmra.mxu0 %v1428
        %v1634 = vpop.f32.mrf.mxu0
        %v1635 = vadd.f32 %v1488, %v1634
        %v1636 = vpop.f32.mrf.mxu0
        %v1637 = vadd.f32 %v1488, %v1636
        %1638 = vmatprep.mubr.f32.mxu0 %v1431
        %1639 = vmatmul.mubr.f32.gmra.mxu0 %v1430
        %v1640 = vpop.f32.mrf.mxu0
        %v1641 = vadd.f32 %v1493, %v1640
        %v1642 = vpop.f32.mrf.mxu0
        %v1643 = vadd.f32 %v1493, %v1642
        %1644 = vmatprep.mubr.f32.mxu0 %v1433
        %1645 = vmatmul.mubr.f32.gmra.mxu0 %v1432
        %v1646 = vpop.f32.mrf.mxu0
        %v1647 = vadd.f32 %v1498, %v1646
        %v1648 = vpop.f32.mrf.mxu0
        %v1649 = vadd.f32 %v1498, %v1648
        %1650 = vmatprep.mubr.f32.mxu0 %v1435
        %1651 = vmatmul.mubr.f32.gmra.mxu0 %v1434
        %v1652 = vpop.f32.mrf.mxu0
        %v1653 = vadd.f32 %v1503, %v1652
        %v1654 = vpop.f32.mrf.mxu0
        %v1655 = vadd.f32 %v1503, %v1654
        %1656 = vmatprep.mubr.f32.mxu0 %v1437
        %1657 = vmatmul.mubr.f32.gmra.mxu0 %v1436
        %v1658 = vpop.f32.mrf.mxu0
        %v1659 = vadd.f32 %v1508, %v1658
        %v1660 = vpop.f32.mrf.mxu0
        %v1661 = vadd.f32 %v1508, %v1660
        %1662 = vmatprep.mubr.f32.mxu0 %v1439
        %1663 = vmatmul.mubr.f32.gmra.mxu0 %v1438
        %v1664 = vpop.f32.mrf.mxu0
        %v1665 = vadd.f32 %v1513, %v1664
        %v1666 = vpop.f32.mrf.mxu0
        %v1667 = vadd.f32 %v1513, %v1666
        %1668 = vmatprep.mubr.f32.mxu0 %v1441
        %1669 = vmatmul.mubr.f32.gmra.mxu0 %v1440
        %v1670 = vpop.f32.mrf.mxu0
        %v1671 = vadd.f32 %v1518, %v1670
        %v1672 = vpop.f32.mrf.mxu0
        %v1673 = vadd.f32 %v1518, %v1672
        %1674 = vmatprep.mubr.f32.mxu0 %v1443
        %1675 = vmatmul.mubr.f32.gmra.mxu0 %v1442
        %v1676 = vpop.f32.mrf.mxu0
        %v1677 = vadd.f32 %v1523, %v1676
        %v1678 = vpop.f32.mrf.mxu0
        %v1679 = vadd.f32 %v1523, %v1678
        %1680 = vmatprep.mubr.f32.mxu0 %v1445
        %1681 = vmatmul.mubr.f32.gmra.mxu0 %v1444
        %v1682 = vpop.f32.mrf.mxu0
        %v1683 = vadd.f32 %v1528, %v1682
        %v1684 = vpop.f32.mrf.mxu0
        %v1685 = vadd.f32 %v1528, %v1684
        %1686 = vmatprep.mubr.f32.mxu0 %v1447
        %1687 = vmatmul.mubr.f32.gmra.mxu0 %v1446
        %v1688 = vpop.f32.mrf.mxu0
        %v1689 = vadd.f32 %v1533, %v1688
        %v1690 = vpop.f32.mrf.mxu0
        %v1691 = vadd.f32 %v1533, %v1690
        %1692 = vmatprep.mubr.f32.mxu0 %v1449
        %1693 = vmatmul.mubr.f32.gmra.mxu0 %v1448
        %v1694 = vpop.f32.mrf.mxu0
        %v1695 = vadd.f32 %v1538, %v1694
        %v1696 = vpop.f32.mrf.mxu0
        %v1697 = vadd.f32 %v1538, %v1696
        %1698 = vmatprep.mubr.f32.mxu0 %v1451
        %1699 = vmatmul.mubr.f32.gmra.mxu0 %v1450
        %v1700 = vpop.f32.mrf.mxu0
        %v1701 = vadd.f32 %v1543, %v1700
        %v1702 = vpop.f32.mrf.mxu0
        %v1703 = vadd.f32 %v1543, %v1702
        %1704 = vmatprep.mubr.f32.mxu0 %v1453
        %1705 = vmatmul.mubr.f32.gmra.mxu0 %v1452
        %v1706 = vpop.f32.mrf.mxu0
        %v1707 = vadd.f32 %v1548, %v1706
        %v1708 = vpop.f32.mrf.mxu0
        %v1709 = vadd.f32 %v1548, %v1708
        %1710 = vdwg.mxu0
        %1711 = vmatprep.subr.mxu0 %v1357
        %1712 = vmatpush1.msra.mxu0 %v1356
        %1713 = vmatprep.subr.mxu0 %v1353
        %1714 = vmatpush1.msra.mxu0 %v1352
        %1715 = vmatprep.subr.mxu0 %v1349
        %1716 = vmatpush1.msra.mxu0 %v1348
        %1717 = vmatprep.subr.mxu0 %v1345
        %1718 = vmatpush1.msra.mxu0 %v1344
        %1719 = vmatprep.subr.mxu0 %v1341
        %1720 = vmatpush1.msra.mxu0 %v1340
        %1721 = vmatprep.subr.mxu0 %v1337
        %1722 = vmatpush1.msra.mxu0 %v1336
        %1723 = vmatprep.subr.mxu0 %v1333
        %1724 = vmatpush1.msra.mxu0 %v1332
        %1725 = vmatprep.subr.mxu0 %v1329
        %1726 = vmatpush1.msra.mxu0 %v1328
        %1727 = vmatprep.subr.mxu0 %v1325
        %1728 = vmatpush1.msra.mxu0 %v1324
        %1729 = vmatprep.subr.mxu0 %v1321
        %1730 = vmatpush1.msra.mxu0 %v1320
        %1731 = vmatprep.subr.mxu0 %v1317
        %1732 = vmatpush1.msra.mxu0 %v1316
        %1733 = vmatprep.subr.mxu0 %v1313
        %1734 = vmatpush1.msra.mxu0 %v1312
        %1735 = vmatprep.subr.mxu0 %v1309
        %1736 = vmatpush1.msra.mxu0 %v1308
        %1737 = vmatprep.subr.mxu0 %v1305
        %1738 = vmatpush1.msra.mxu0 %v1304
        %1739 = vmatprep.subr.mxu0 %v1301
        %1740 = vmatpush1.msra.mxu0 %v1300
        %1741 = vmatprep.subr.mxu0 %v1297
        %1742 = vmatpush1.msra.mxu0 %v1296
        %1743 = vmatprep.subr.mxu0 %v1421
        %1744 = vmatpush2.msra.mxu0 %v1420
        %1745 = vmatprep.subr.mxu0 %v1417
        %1746 = vmatpush2.msra.mxu0 %v1416
        %1747 = vmatprep.subr.mxu0 %v1413
        %1748 = vmatpush2.msra.mxu0 %v1412
        %1749 = vmatprep.subr.mxu0 %v1409
        %1750 = vmatpush2.msra.mxu0 %v1408
        %1751 = vmatprep.subr.mxu0 %v1405
        %1752 = vmatpush2.msra.mxu0 %v1404
        %1753 = vmatprep.subr.mxu0 %v1401
        %1754 = vmatpush2.msra.mxu0 %v1400
        %1755 = vmatprep.subr.mxu0 %v1397
        %1756 = vmatpush2.msra.mxu0 %v1396
        %1757 = vmatprep.subr.mxu0 %v1393
        %1758 = vmatpush2.msra.mxu0 %v1392
        %1759 = vmatprep.subr.mxu0 %v1389
        %1760 = vmatpush2.msra.mxu0 %v1388
        %1761 = vmatprep.subr.mxu0 %v1385
        %1762 = vmatpush2.msra.mxu0 %v1384
        %1763 = vmatprep.subr.mxu0 %v1381
        %1764 = vmatpush2.msra.mxu0 %v1380
        %1765 = vmatprep.subr.mxu0 %v1377
        %1766 = vmatpush2.msra.mxu0 %v1376
        %1767 = vmatprep.subr.mxu0 %v1373
        %1768 = vmatpush2.msra.mxu0 %v1372
        %1769 = vmatprep.subr.mxu0 %v1369
        %1770 = vmatpush2.msra.mxu0 %v1368
        %1771 = vmatprep.subr.mxu0 %v1365
        %1772 = vmatpush2.msra.mxu0 %v1364
        %1773 = vmatprep.subr.mxu0 %v1361
        %1774 = vmatpush2.msra.mxu0 %v1360
        %1775 = vmatprep.mubr.f32.mxu0 %v1423
        %1776 = vmatmul.mubr.f32.gmra.mxu0 %v1422
        %v1777 = vpop.f32.mrf.mxu0
        %v1778 = vadd.f32 %v1473, %v1777
        %v1779 = vpop.f32.mrf.mxu0
        %v1780 = vadd.f32 %v1473, %v1779
        %1781 = vmatprep.mubr.f32.mxu0 %v1425
        %1782 = vmatmul.mubr.f32.gmra.mxu0 %v1424
        %v1783 = vpop.f32.mrf.mxu0
        %v1784 = vadd.f32 %v1478, %v1783
        %v1785 = vpop.f32.mrf.mxu0
        %v1786 = vadd.f32 %v1478, %v1785
        %1787 = vmatprep.mubr.f32.mxu0 %v1427
        %1788 = vmatmul.mubr.f32.gmra.mxu0 %v1426
        %v1789 = vpop.f32.mrf.mxu0
        %v1790 = vadd.f32 %v1483, %v1789
        %v1791 = vpop.f32.mrf.mxu0
        %v1792 = vadd.f32 %v1483, %v1791
        %1793 = vmatprep.mubr.f32.mxu0 %v1429
        %1794 = vmatmul.mubr.f32.gmra.mxu0 %v1428
        %v1795 = vpop.f32.mrf.mxu0
        %v1796 = vadd.f32 %v1488, %v1795
        %v1797 = vpop.f32.mrf.mxu0
        %v1798 = vadd.f32 %v1488, %v1797
        %1799 = vmatprep.mubr.f32.mxu0 %v1431
        %1800 = vmatmul.mubr.f32.gmra.mxu0 %v1430
        %v1801 = vpop.f32.mrf.mxu0
        %v1802 = vadd.f32 %v1493, %v1801
        %v1803 = vpop.f32.mrf.mxu0
        %v1804 = vadd.f32 %v1493, %v1803
        %1805 = vmatprep.mubr.f32.mxu0 %v1433
        %1806 = vmatmul.mubr.f32.gmra.mxu0 %v1432
        %v1807 = vpop.f32.mrf.mxu0
        %v1808 = vadd.f32 %v1498, %v1807
        %v1809 = vpop.f32.mrf.mxu0
        %v1810 = vadd.f32 %v1498, %v1809
        %1811 = vmatprep.mubr.f32.mxu0 %v1435
        %1812 = vmatmul.mubr.f32.gmra.mxu0 %v1434
        %v1813 = vpop.f32.mrf.mxu0
        %v1814 = vadd.f32 %v1503, %v1813
        %v1815 = vpop.f32.mrf.mxu0
        %v1816 = vadd.f32 %v1503, %v1815
        %1817 = vmatprep.mubr.f32.mxu0 %v1437
        %1818 = vmatmul.mubr.f32.gmra.mxu0 %v1436
        %v1819 = vpop.f32.mrf.mxu0
        %v1820 = vadd.f32 %v1508, %v1819
        %v1821 = vpop.f32.mrf.mxu0
        %v1822 = vadd.f32 %v1508, %v1821
        %1823 = vmatprep.mubr.f32.mxu0 %v1439
        %1824 = vmatmul.mubr.f32.gmra.mxu0 %v1438
        %v1825 = vpop.f32.mrf.mxu0
        %v1826 = vadd.f32 %v1513, %v1825
        %v1827 = vpop.f32.mrf.mxu0
        %v1828 = vadd.f32 %v1513, %v1827
        %1829 = vmatprep.mubr.f32.mxu0 %v1441
        %1830 = vmatmul.mubr.f32.gmra.mxu0 %v1440
        %v1831 = vpop.f32.mrf.mxu0
        %v1832 = vadd.f32 %v1518, %v1831
        %v1833 = vpop.f32.mrf.mxu0
        %v1834 = vadd.f32 %v1518, %v1833
        %1835 = vmatprep.mubr.f32.mxu0 %v1443
        %1836 = vmatmul.mubr.f32.gmra.mxu0 %v1442
        %v1837 = vpop.f32.mrf.mxu0
        %v1838 = vadd.f32 %v1523, %v1837
        %v1839 = vpop.f32.mrf.mxu0
        %v1840 = vadd.f32 %v1523, %v1839
        %1841 = vmatprep.mubr.f32.mxu0 %v1445
        %1842 = vmatmul.mubr.f32.gmra.mxu0 %v1444
        %v1843 = vpop.f32.mrf.mxu0
        %v1844 = vadd.f32 %v1528, %v1843
        %v1845 = vpop.f32.mrf.mxu0
        %v1846 = vadd.f32 %v1528, %v1845
        %1847 = vmatprep.mubr.f32.mxu0 %v1447
        %1848 = vmatmul.mubr.f32.gmra.mxu0 %v1446
        %v1849 = vpop.f32.mrf.mxu0
        %v1850 = vadd.f32 %v1533, %v1849
        %v1851 = vpop.f32.mrf.mxu0
        %v1852 = vadd.f32 %v1533, %v1851
        %1853 = vmatprep.mubr.f32.mxu0 %v1449
        %1854 = vmatmul.mubr.f32.gmra.mxu0 %v1448
        %v1855 = vpop.f32.mrf.mxu0
        %v1856 = vadd.f32 %v1538, %v1855
        %v1857 = vpop.f32.mrf.mxu0
        %v1858 = vadd.f32 %v1538, %v1857
        %1859 = vmatprep.mubr.f32.mxu0 %v1451
        %1860 = vmatmul.mubr.f32.gmra.mxu0 %v1450
        %v1861 = vpop.f32.mrf.mxu0
        %v1862 = vadd.f32 %v1543, %v1861
        %v1863 = vpop.f32.mrf.mxu0
        %v1864 = vadd.f32 %v1543, %v1863
        %1865 = vmatprep.mubr.f32.mxu0 %v1453
        %1866 = vmatmul.mubr.f32.gmra.mxu0 %v1452
        %v1867 = vpop.f32.mrf.mxu0
        %v1868 = vadd.f32 %v1548, %v1867
        %v1869 = vpop.f32.mrf.mxu0
        %v1870 = vadd.f32 %v1548, %v1869
        %1871 = vdwg.mxu0
        %v1872 = vmax.f32 %v1617, 0.0
        %v1873 = vmax.f32 %v1619, 0.0
        %v1874 = vmax.f32 %v1778, 0.0
        %v1875 = vmax.f32 %v1780, 0.0
        %v1876 = vmax.f32 %v1623, 0.0
        %v1877 = vmax.f32 %v1625, 0.0
        %v1878 = vmax.f32 %v1784, 0.0
        %v1879 = vmax.f32 %v1786, 0.0
        %v1880 = vmax.f32 %v1629, 0.0
        %v1881 = vmax.f32 %v1631, 0.0
        %v1882 = vmax.f32 %v1790, 0.0
        %v1883 = vmax.f32 %v1792, 0.0
        %v1884 = vmax.f32 %v1635, 0.0
        %v1885 = vmax.f32 %v1637, 0.0
        %v1886 = vmax.f32 %v1796, 0.0
        %v1887 = vmax.f32 %v1798, 0.0
        %v1888 = vmax.f32 %v1641, 0.0
        %v1889 = vmax.f32 %v1643, 0.0
        %v1890 = vmax.f32 %v1802, 0.0
        %v1891 = vmax.f32 %v1804, 0.0
        %v1892 = vmax.f32 %v1647, 0.0
        %v1893 = vmax.f32 %v1649, 0.0
        %v1894 = vmax.f32 %v1808, 0.0
        %v1895 = vmax.f32 %v1810, 0.0
        %v1896 = vmax.f32 %v1653, 0.0
        %v1897 = vmax.f32 %v1655, 0.0
        %v1898 = vmax.f32 %v1814, 0.0
        %v1899 = vmax.f32 %v1816, 0.0
        %v1900 = vmax.f32 %v1659, 0.0
        %v1901 = vmax.f32 %v1661, 0.0
        %v1902 = vmax.f32 %v1820, 0.0
        %v1903 = vmax.f32 %v1822, 0.0
        %v1904 = vmax.f32 %v1665, 0.0
        %v1905 = vmax.f32 %v1667, 0.0
        %v1906 = vmax.f32 %v1826, 0.0
        %v1907 = vmax.f32 %v1828, 0.0
        %v1908 = vmax.f32 %v1671, 0.0
        %v1909 = vmax.f32 %v1673, 0.0
        %v1910 = vmax.f32 %v1832, 0.0
        %v1911 = vmax.f32 %v1834, 0.0
        %v1912 = vmax.f32 %v1677, 0.0
        %v1913 = vmax.f32 %v1679, 0.0
        %v1914 = vmax.f32 %v1838, 0.0
        %v1915 = vmax.f32 %v1840, 0.0
        %v1916 = vmax.f32 %v1683, 0.0
        %v1917 = vmax.f32 %v1685, 0.0
        %v1918 = vmax.f32 %v1844, 0.0
        %v1919 = vmax.f32 %v1846, 0.0
        %v1920 = vmax.f32 %v1689, 0.0
        %v1921 = vmax.f32 %v1691, 0.0
        %v1922 = vmax.f32 %v1850, 0.0
        %v1923 = vmax.f32 %v1852, 0.0
        %v1924 = vmax.f32 %v1695, 0.0
        %v1925 = vmax.f32 %v1697, 0.0
        %v1926 = vmax.f32 %v1856, 0.0
        %v1927 = vmax.f32 %v1858, 0.0
        %v1928 = vmax.f32 %v1701, 0.0
        %v1929 = vmax.f32 %v1703, 0.0
        %v1930 = vmax.f32 %v1862, 0.0
        %v1931 = vmax.f32 %v1864, 0.0
        %v1932 = vmax.f32 %v1707, 0.0
        %v1933 = vmax.f32 %v1709, 0.0
        %v1934 = vmax.f32 %v1868, 0.0
        %v1935 = vmax.f32 %v1870, 0.0
        %v1936 = vld [vmem:[%s5] sm:$0xff]
        %v1937 = vld [vmem:[%s5 + $0x8] sm:$0xff]
        %v1938 = vld [vmem:[%s5 + $0x10] sm:$0xff]
        %v1939 = vld [vmem:[%s5 + $0x18] sm:$0xff]
        %v1940 = vld [vmem:[%s5 + $0x20] sm:$0xff]
        %v1941 = vld [vmem:[%s5 + $0x28] sm:$0xff]
        %v1942 = vld [vmem:[%s5 + $0x30] sm:$0xff]
        %v1943 = vld [vmem:[%s5 + $0x38] sm:$0xff]
        %v1944 = vld [vmem:[%s6] sm:$0xff]
        %v1945 = vld [vmem:[%s6 + $0x8] sm:$0xff]
        %v1946 = vld [vmem:[%s6 + $0x10] sm:$0xff]
        %v1947 = vld [vmem:[%s6 + $0x18] sm:$0xff]
        %v1948 = vld [vmem:[%s6 + $0x20] sm:$0xff]
        %v1949 = vld [vmem:[%s6 + $0x28] sm:$0xff]
        %v1950 = vld [vmem:[%s6 + $0x30] sm:$0xff]
        %v1951 = vld [vmem:[%s6 + $0x38] sm:$0xff]
        %1953 = vset.pattern.permute.xlu0 0
        %1954 = vperm.xlu0 %1953, %v1944
        %v1955 = vpop.permute.xlu0 %1954
        %1958 = vset.pattern.permute.xlu0 0
        %1959 = vperm.xlu0 %1958, %v1945
        %v1960 = vpop.permute.xlu0 %1959
        %1963 = vset.pattern.permute.xlu0 0
        %1964 = vperm.xlu0 %1963, %v1946
        %v1965 = vpop.permute.xlu0 %1964
        %1968 = vset.pattern.permute.xlu0 0
        %1969 = vperm.xlu0 %1968, %v1947
        %v1970 = vpop.permute.xlu0 %1969
        %1973 = vset.pattern.permute.xlu0 0
        %1974 = vperm.xlu0 %1973, %v1948
        %v1975 = vpop.permute.xlu0 %1974
        %1978 = vset.pattern.permute.xlu0 0
        %1979 = vperm.xlu0 %1978, %v1949
        %v1980 = vpop.permute.xlu0 %1979
        %1983 = vset.pattern.permute.xlu0 0
        %1984 = vperm.xlu0 %1983, %v1950
        %v1985 = vpop.permute.xlu0 %1984
        %1988 = vset.pattern.permute.xlu0 0
        %1989 = vperm.xlu0 %1988, %v1951
        %v1990 = vpop.permute.xlu0 %1989
        %1992 = vmatprep.subr.mxu0 %v1933
        %1993 = vmatpush1.msra.mxu0 %v1932
        %1994 = vmatprep.subr.mxu0 %v1929
        %1995 = vmatpush1.msra.mxu0 %v1928
        %1996 = vmatprep.subr.mxu0 %v1925
        %1997 = vmatpush1.msra.mxu0 %v1924
        %1998 = vmatprep.subr.mxu0 %v1921
        %1999 = vmatpush1.msra.mxu0 %v1920
        %2000 = vmatprep.subr.mxu0 %v1917
        %2001 = vmatpush1.msra.mxu0 %v1916
        %2002 = vmatprep.subr.mxu0 %v1913
        %2003 = vmatpush1.msra.mxu0 %v1912
        %2004 = vmatprep.subr.mxu0 %v1909
        %2005 = vmatpush1.msra.mxu0 %v1908
        %2006 = vmatprep.subr.mxu0 %v1905
        %2007 = vmatpush1.msra.mxu0 %v1904
        %2008 = vmatprep.subr.mxu0 %v1901
        %2009 = vmatpush1.msra.mxu0 %v1900
        %2010 = vmatprep.subr.mxu0 %v1897
        %2011 = vmatpush1.msra.mxu0 %v1896
        %2012 = vmatprep.subr.mxu0 %v1893
        %2013 = vmatpush1.msra.mxu0 %v1892
        %2014 = vmatprep.subr.mxu0 %v1889
        %2015 = vmatpush1.msra.mxu0 %v1888
        %2016 = vmatprep.subr.mxu0 %v1885
        %2017 = vmatpush1.msra.mxu0 %v1884
        %2018 = vmatprep.subr.mxu0 %v1881
        %2019 = vmatpush1.msra.mxu0 %v1880
        %2020 = vmatprep.subr.mxu0 %v1877
        %2021 = vmatpush1.msra.mxu0 %v1876
        %2022 = vmatprep.subr.mxu0 %v1873
        %2023 = vmatpush1.msra.mxu0 %v1872
        %2024 = vmatprep.subr.mxu0 0.0
        %2025 = vmatpush2.msra.mxu0 0.0
        %2026 = vmatprep.subr.mxu0 0.0
        %2027 = vmatpush2.msra.mxu0 0.0
        %2028 = vmatprep.subr.mxu0 0.0
        %2029 = vmatpush2.msra.mxu0 0.0
        %2030 = vmatprep.subr.mxu0 0.0
        %2031 = vmatpush2.msra.mxu0 0.0
        %2032 = vmatprep.subr.mxu0 0.0
        %2033 = vmatpush2.msra.mxu0 0.0
        %2034 = vmatprep.subr.mxu0 0.0
        %2035 = vmatpush2.msra.mxu0 0.0
        %2036 = vmatprep.subr.mxu0 0.0
        %2037 = vmatpush2.msra.mxu0 0.0
        %2038 = vmatprep.subr.mxu0 0.0
        %2039 = vmatpush2.msra.mxu0 0.0
        %2040 = vmatprep.subr.mxu0 0.0
        %2041 = vmatpush2.msra.mxu0 0.0
        %2042 = vmatprep.subr.mxu0 0.0
        %2043 = vmatpush2.msra.mxu0 0.0
        %2044 = vmatprep.subr.mxu0 0.0
        %2045 = vmatpush2.msra.mxu0 0.0
        %2046 = vmatprep.subr.mxu0 0.0
        %2047 = vmatpush2.msra.mxu0 0.0
        %2048 = vmatprep.subr.mxu0 0.0
        %2049 = vmatpush2.msra.mxu0 0.0
        %2050 = vmatprep.subr.mxu0 0.0
        %2051 = vmatpush2.msra.mxu0 0.0
        %2052 = vmatprep.subr.mxu0 0.0
        %2053 = vmatpush2.msra.mxu0 0.0
        %2054 = vmatprep.subr.mxu0 0.0
        %2055 = vmatpush2.msra.mxu0 0.0
        %2056 = vmatprep.mubr.f32.mxu0 0.0
        %2057 = vmatmul.mubr.f32.gmra.mxu0 %v1936
        %v2058 = vpop.f32.mrf.mxu0
        %v2059 = vadd.f32 %v1955, %v2058
        %v2060 = vpop.f32.mrf.mxu0
        %v2061 = vadd.f32 %v1955, %v2060
        %2062 = vmatprep.mubr.f32.mxu0 0.0
        %2063 = vmatmul.mubr.f32.gmra.mxu0 %v1937
        %v2064 = vpop.f32.mrf.mxu0
        %v2065 = vadd.f32 %v1960, %v2064
        %v2066 = vpop.f32.mrf.mxu0
        %v2067 = vadd.f32 %v1960, %v2066
        %2068 = vmatprep.mubr.f32.mxu0 0.0
        %2069 = vmatmul.mubr.f32.gmra.mxu0 %v1938
        %v2070 = vpop.f32.mrf.mxu0
        %v2071 = vadd.f32 %v1965, %v2070
        %v2072 = vpop.f32.mrf.mxu0
        %v2073 = vadd.f32 %v1965, %v2072
        %2074 = vmatprep.mubr.f32.mxu0 0.0
        %2075 = vmatmul.mubr.f32.gmra.mxu0 %v1939
        %v2076 = vpop.f32.mrf.mxu0
        %v2077 = vadd.f32 %v1970, %v2076
        %v2078 = vpop.f32.mrf.mxu0
        %v2079 = vadd.f32 %v1970, %v2078
        %2080 = vmatprep.mubr.f32.mxu0 0.0
        %2081 = vmatmul.mubr.f32.gmra.mxu0 %v1940
        %v2082 = vpop.f32.mrf.mxu0
        %v2083 = vadd.f32 %v1975, %v2082
        %v2084 = vpop.f32.mrf.mxu0
        %v2085 = vadd.f32 %v1975, %v2084
        %2086 = vmatprep.mubr.f32.mxu0 0.0
        %2087 = vmatmul.mubr.f32.gmra.mxu0 %v1941
        %v2088 = vpop.f32.mrf.mxu0
        %v2089 = vadd.f32 %v1980, %v2088
        %v2090 = vpop.f32.mrf.mxu0
        %v2091 = vadd.f32 %v1980, %v2090
        %2092 = vmatprep.mubr.f32.mxu0 0.0
        %2093 = vmatmul.mubr.f32.gmra.mxu0 %v1942
        %v2094 = vpop.f32.mrf.mxu0
        %v2095 = vadd.f32 %v1985, %v2094
        %v2096 = vpop.f32.mrf.mxu0
        %v2097 = vadd.f32 %v1985, %v2096
        %2098 = vmatprep.mubr.f32.mxu0 0.0
        %2099 = vmatmul.mubr.f32.gmra.mxu0 %v1943
        %v2100 = vpop.f32.mrf.mxu0
        %v2101 = vadd.f32 %v1990, %v2100
        %v2102 = vpop.f32.mrf.mxu0
        %v2103 = vadd.f32 %v1990, %v2102
        %2104 = vdwg.mxu0
        %2105 = vmatprep.subr.mxu0 %v1935
        %2106 = vmatpush1.msra.mxu0 %v1934
        %2107 = vmatprep.subr.mxu0 %v1931
        %2108 = vmatpush1.msra.mxu0 %v1930
        %2109 = vmatprep.subr.mxu0 %v1927
        %2110 = vmatpush1.msra.mxu0 %v1926
        %2111 = vmatprep.subr.mxu0 %v1923
        %2112 = vmatpush1.msra.mxu0 %v1922
        %2113 = vmatprep.subr.mxu0 %v1919
        %2114 = vmatpush1.msra.mxu0 %v1918
        %2115 = vmatprep.subr.mxu0 %v1915
        %2116 = vmatpush1.msra.mxu0 %v1914
        %2117 = vmatprep.subr.mxu0 %v1911
        %2118 = vmatpush1.msra.mxu0 %v1910
        %2119 = vmatprep.subr.mxu0 %v1907
        %2120 = vmatpush1.msra.mxu0 %v1906
        %2121 = vmatprep.subr.mxu0 %v1903
        %2122 = vmatpush1.msra.mxu0 %v1902
        %2123 = vmatprep.subr.mxu0 %v1899
        %2124 = vmatpush1.msra.mxu0 %v1898
        %2125 = vmatprep.subr.mxu0 %v1895
        %2126 = vmatpush1.msra.mxu0 %v1894
        %2127 = vmatprep.subr.mxu0 %v1891
        %2128 = vmatpush1.msra.mxu0 %v1890
        %2129 = vmatprep.subr.mxu0 %v1887
        %2130 = vmatpush1.msra.mxu0 %v1886
        %2131 = vmatprep.subr.mxu0 %v1883
        %2132 = vmatpush1.msra.mxu0 %v1882
        %2133 = vmatprep.subr.mxu0 %v1879
        %2134 = vmatpush1.msra.mxu0 %v1878
        %2135 = vmatprep.subr.mxu0 %v1875
        %2136 = vmatpush1.msra.mxu0 %v1874
        %2137 = vmatprep.subr.mxu0 0.0
        %2138 = vmatpush2.msra.mxu0 0.0
        %2139 = vmatprep.subr.mxu0 0.0
        %2140 = vmatpush2.msra.mxu0 0.0
        %2141 = vmatprep.subr.mxu0 0.0
        %2142 = vmatpush2.msra.mxu0 0.0
        %2143 = vmatprep.subr.mxu0 0.0
        %2144 = vmatpush2.msra.mxu0 0.0
        %2145 = vmatprep.subr.mxu0 0.0
        %2146 = vmatpush2.msra.mxu0 0.0
        %2147 = vmatprep.subr.mxu0 0.0
        %2148 = vmatpush2.msra.mxu0 0.0
        %2149 = vmatprep.subr.mxu0 0.0
        %2150 = vmatpush2.msra.mxu0 0.0
        %2151 = vmatprep.subr.mxu0 0.0
        %2152 = vmatpush2.msra.mxu0 0.0
        %2153 = vmatprep.subr.mxu0 0.0
        %2154 = vmatpush2.msra.mxu0 0.0
        %2155 = vmatprep.subr.mxu0 0.0
        %2156 = vmatpush2.msra.mxu0 0.0
        %2157 = vmatprep.subr.mxu0 0.0
        %2158 = vmatpush2.msra.mxu0 0.0
        %2159 = vmatprep.subr.mxu0 0.0
        %2160 = vmatpush2.msra.mxu0 0.0
        %2161 = vmatprep.subr.mxu0 0.0
        %2162 = vmatpush2.msra.mxu0 0.0
        %2163 = vmatprep.subr.mxu0 0.0
        %2164 = vmatpush2.msra.mxu0 0.0
        %2165 = vmatprep.subr.mxu0 0.0
        %2166 = vmatpush2.msra.mxu0 0.0
        %2167 = vmatprep.subr.mxu0 0.0
        %2168 = vmatpush2.msra.mxu0 0.0
        %2169 = vmatprep.mubr.f32.mxu0 0.0
        %2170 = vmatmul.mubr.f32.gmra.mxu0 %v1936
        %v2171 = vpop.f32.mrf.mxu0
        %v2172 = vadd.f32 %v1955, %v2171
        %v2173 = vpop.f32.mrf.mxu0
        %v2174 = vadd.f32 %v1955, %v2173
        %2175 = vmatprep.mubr.f32.mxu0 0.0
        %2176 = vmatmul.mubr.f32.gmra.mxu0 %v1937
        %v2177 = vpop.f32.mrf.mxu0
        %v2178 = vadd.f32 %v1960, %v2177
        %v2179 = vpop.f32.mrf.mxu0
        %v2180 = vadd.f32 %v1960, %v2179
        %2181 = vmatprep.mubr.f32.mxu0 0.0
        %2182 = vmatmul.mubr.f32.gmra.mxu0 %v1938
        %v2183 = vpop.f32.mrf.mxu0
        %v2184 = vadd.f32 %v1965, %v2183
        %v2185 = vpop.f32.mrf.mxu0
        %v2186 = vadd.f32 %v1965, %v2185
        %2187 = vmatprep.mubr.f32.mxu0 0.0
        %2188 = vmatmul.mubr.f32.gmra.mxu0 %v1939
        %v2189 = vpop.f32.mrf.mxu0
        %v2190 = vadd.f32 %v1970, %v2189
        %v2191 = vpop.f32.mrf.mxu0
        %v2192 = vadd.f32 %v1970, %v2191
        %2193 = vmatprep.mubr.f32.mxu0 0.0
        %2194 = vmatmul.mubr.f32.gmra.mxu0 %v1940
        %v2195 = vpop.f32.mrf.mxu0
        %v2196 = vadd.f32 %v1975, %v2195
        %v2197 = vpop.f32.mrf.mxu0
        %v2198 = vadd.f32 %v1975, %v2197
        %2199 = vmatprep.mubr.f32.mxu0 0.0
        %2200 = vmatmul.mubr.f32.gmra.mxu0 %v1941
        %v2201 = vpop.f32.mrf.mxu0
        %v2202 = vadd.f32 %v1980, %v2201
        %v2203 = vpop.f32.mrf.mxu0
        %v2204 = vadd.f32 %v1980, %v2203
        %2205 = vmatprep.mubr.f32.mxu0 0.0
        %2206 = vmatmul.mubr.f32.gmra.mxu0 %v1942
        %v2207 = vpop.f32.mrf.mxu0
        %v2208 = vadd.f32 %v1985, %v2207
        %v2209 = vpop.f32.mrf.mxu0
        %v2210 = vadd.f32 %v1985, %v2209
        %2211 = vmatprep.mubr.f32.mxu0 0.0
        %2212 = vmatmul.mubr.f32.gmra.mxu0 %v1943
        %v2213 = vpop.f32.mrf.mxu0
        %v2214 = vadd.f32 %v1990, %v2213
        %v2215 = vpop.f32.mrf.mxu0
        %v2216 = vadd.f32 %v1990, %v2215
        %2217 = vdwg.mxu0
        %v2218 = vmax.f32 %v2059, 0.0
        %v2219 = vmax.f32 %v2061, 0.0
        %v2220 = vmax.f32 %v2172, 0.0
        %v2221 = vmax.f32 %v2174, 0.0
        %v2222 = vmax.f32 %v2065, 0.0
        %v2223 = vmax.f32 %v2067, 0.0
        %v2224 = vmax.f32 %v2178, 0.0
        %v2225 = vmax.f32 %v2180, 0.0
        %v2226 = vmax.f32 %v2071, 0.0
        %v2227 = vmax.f32 %v2073, 0.0
        %v2228 = vmax.f32 %v2184, 0.0
        %v2229 = vmax.f32 %v2186, 0.0
        %v2230 = vmax.f32 %v2077, 0.0
        %v2231 = vmax.f32 %v2079, 0.0
        %v2232 = vmax.f32 %v2190, 0.0
        %v2233 = vmax.f32 %v2192, 0.0
        %v2234 = vmax.f32 %v2083, 0.0
        %v2235 = vmax.f32 %v2085, 0.0
        %v2236 = vmax.f32 %v2196, 0.0
        %v2237 = vmax.f32 %v2198, 0.0
        %v2238 = vmax.f32 %v2089, 0.0
        %v2239 = vmax.f32 %v2091, 0.0
        %v2240 = vmax.f32 %v2202, 0.0
        %v2241 = vmax.f32 %v2204, 0.0
        %v2242 = vmax.f32 %v2095, 0.0
        %v2243 = vmax.f32 %v2097, 0.0
        %v2244 = vmax.f32 %v2208, 0.0
        %v2245 = vmax.f32 %v2210, 0.0
        %v2246 = vmax.f32 %v2101, 0.0
        %v2247 = vmax.f32 %v2103, 0.0
        %v2248 = vmax.f32 %v2214, 0.0
        %v2249 = vmax.f32 %v2216, 0.0
        %v2250 = vld [vmem:[%s7] sm:$0x7]
        %v2251 = vld [vmem:[%s8] sm:$0x7]
        %2253 = vset.pattern.permute.xlu0 0
        %2254 = vperm.xlu0 %2253, %v2251
        %v2255 = vpop.permute.xlu0 %2254
        %vm2257 = vcmask 523264
        %v2259 = vsel %vm2257, %v2250, 0
        %2261 = vmatprep.subr.mxu0 0.0
        %2262 = vmatpush1.msra.mxu0 0.0
        %2263 = vmatprep.subr.mxu0 0.0
        %2264 = vmatpush1.msra.mxu0 0.0
        %2265 = vmatprep.subr.mxu0 0.0
        %2266 = vmatpush1.msra.mxu0 0.0
        %2267 = vmatprep.subr.mxu0 0.0
        %2268 = vmatpush1.msra.mxu0 0.0
        %2269 = vmatprep.subr.mxu0 0.0
        %2270 = vmatpush1.msra.mxu0 0.0
        %2271 = vmatprep.subr.mxu0 0.0
        %2272 = vmatpush1.msra.mxu0 0.0
        %2273 = vmatprep.subr.mxu0 0.0
        %2274 = vmatpush1.msra.mxu0 0.0
        %2275 = vmatprep.subr.mxu0 0.0
        %2276 = vmatpush1.msra.mxu0 0.0
        %2277 = vmatprep.subr.mxu0 %v2247
        %2278 = vmatpush1.msra.mxu0 %v2246
        %2279 = vmatprep.subr.mxu0 %v2243
        %2280 = vmatpush1.msra.mxu0 %v2242
        %2281 = vmatprep.subr.mxu0 %v2239
        %2282 = vmatpush1.msra.mxu0 %v2238
        %2283 = vmatprep.subr.mxu0 %v2235
        %2284 = vmatpush1.msra.mxu0 %v2234
        %2285 = vmatprep.subr.mxu0 %v2231
        %2286 = vmatpush1.msra.mxu0 %v2230
        %2287 = vmatprep.subr.mxu0 %v2227
        %2288 = vmatpush1.msra.mxu0 %v2226
        %2289 = vmatprep.subr.mxu0 %v2223
        %2290 = vmatpush1.msra.mxu0 %v2222
        %2291 = vmatprep.subr.mxu0 %v2219
        %2292 = vmatpush1.msra.mxu0 %v2218
        %2293 = vmatprep.subr.mxu0 0.0
        %2294 = vmatpush2.msra.mxu0 0.0
        %2295 = vmatprep.subr.mxu0 0.0
        %2296 = vmatpush2.msra.mxu0 0.0
        %2297 = vmatprep.subr.mxu0 0.0
        %2298 = vmatpush2.msra.mxu0 0.0
        %2299 = vmatprep.subr.mxu0 0.0
        %2300 = vmatpush2.msra.mxu0 0.0
        %2301 = vmatprep.subr.mxu0 0.0
        %2302 = vmatpush2.msra.mxu0 0.0
        %2303 = vmatprep.subr.mxu0 0.0
        %2304 = vmatpush2.msra.mxu0 0.0
        %2305 = vmatprep.subr.mxu0 0.0
        %2306 = vmatpush2.msra.mxu0 0.0
        %2307 = vmatprep.subr.mxu0 0.0
        %2308 = vmatpush2.msra.mxu0 0.0
        %2309 = vmatprep.subr.mxu0 0.0
        %2310 = vmatpush2.msra.mxu0 0.0
        %2311 = vmatprep.subr.mxu0 0.0
        %2312 = vmatpush2.msra.mxu0 0.0
        %2313 = vmatprep.subr.mxu0 0.0
        %2314 = vmatpush2.msra.mxu0 0.0
        %2315 = vmatprep.subr.mxu0 0.0
        %2316 = vmatpush2.msra.mxu0 0.0
        %2317 = vmatprep.subr.mxu0 0.0
        %2318 = vmatpush2.msra.mxu0 0.0
        %2319 = vmatprep.subr.mxu0 0.0
        %2320 = vmatpush2.msra.mxu0 0.0
        %2321 = vmatprep.subr.mxu0 0.0
        %2322 = vmatpush2.msra.mxu0 0.0
        %2323 = vmatprep.subr.mxu0 0.0
        %2324 = vmatpush2.msra.mxu0 0.0
        %2325 = vmatprep.mubr.f32.mxu0 0.0
        %2326 = vmatmul.mubr.f32.gmra.mxu0 %v2259
        %v2327 = vpop.f32.mrf.mxu0
        %v2328 = vadd.f32 %v2255, %v2327
        %v2329 = vpop.f32.mrf.mxu0
        %v2330 = vadd.f32 %v2255, %v2329
        %2331 = vdwg.mxu0
        %2332 = vmatprep.subr.mxu0 0.0
        %2333 = vmatpush1.msra.mxu0 0.0
        %2334 = vmatprep.subr.mxu0 0.0
        %2335 = vmatpush1.msra.mxu0 0.0
        %2336 = vmatprep.subr.mxu0 0.0
        %2337 = vmatpush1.msra.mxu0 0.0
        %2338 = vmatprep.subr.mxu0 0.0
        %2339 = vmatpush1.msra.mxu0 0.0
        %2340 = vmatprep.subr.mxu0 0.0
        %2341 = vmatpush1.msra.mxu0 0.0
        %2342 = vmatprep.subr.mxu0 0.0
        %2343 = vmatpush1.msra.mxu0 0.0
        %2344 = vmatprep.subr.mxu0 0.0
        %2345 = vmatpush1.msra.mxu0 0.0
        %2346 = vmatprep.subr.mxu0 0.0
        %2347 = vmatpush1.msra.mxu0 0.0
        %2348 = vmatprep.subr.mxu0 %v2249
        %2349 = vmatpush1.msra.mxu0 %v2248
        %2350 = vmatprep.subr.mxu0 %v2245
        %2351 = vmatpush1.msra.mxu0 %v2244
        %2352 = vmatprep.subr.mxu0 %v2241
        %2353 = vmatpush1.msra.mxu0 %v2240
        %2354 = vmatprep.subr.mxu0 %v2237
        %2355 = vmatpush1.msra.mxu0 %v2236
        %2356 = vmatprep.subr.mxu0 %v2233
        %2357 = vmatpush1.msra.mxu0 %v2232
        %2358 = vmatprep.subr.mxu0 %v2229
        %2359 = vmatpush1.msra.mxu0 %v2228
        %2360 = vmatprep.subr.mxu0 %v2225
        %2361 = vmatpush1.msra.mxu0 %v2224
        %2362 = vmatprep.subr.mxu0 %v2221
        %2363 = vmatpush1.msra.mxu0 %v2220
        %2364 = vmatprep.subr.mxu0 0.0
        %2365 = vmatpush2.msra.mxu0 0.0
        %2366 = vmatprep.subr.mxu0 0.0
        %2367 = vmatpush2.msra.mxu0 0.0
        %2368 = vmatprep.subr.mxu0 0.0
        %2369 = vmatpush2.msra.mxu0 0.0
        %2370 = vmatprep.subr.mxu0 0.0
        %2371 = vmatpush2.msra.mxu0 0.0
        %2372 = vmatprep.subr.mxu0 0.0
        %2373 = vmatpush2.msra.mxu0 0.0
        %2374 = vmatprep.subr.mxu0 0.0
        %2375 = vmatpush2.msra.mxu0 0.0
        %2376 = vmatprep.subr.mxu0 0.0
        %2377 = vmatpush2.msra.mxu0 0.0
        %2378 = vmatprep.subr.mxu0 0.0
        %2379 = vmatpush2.msra.mxu0 0.0
        %2380 = vmatprep.subr.mxu0 0.0
        %2381 = vmatpush2.msra.mxu0 0.0
        %2382 = vmatprep.subr.mxu0 0.0
        %2383 = vmatpush2.msra.mxu0 0.0
        %2384 = vmatprep.subr.mxu0 0.0
        %2385 = vmatpush2.msra.mxu0 0.0
        %2386 = vmatprep.subr.mxu0 0.0
        %2387 = vmatpush2.msra.mxu0 0.0
        %2388 = vmatprep.subr.mxu0 0.0
        %2389 = vmatpush2.msra.mxu0 0.0
        %2390 = vmatprep.subr.mxu0 0.0
        %2391 = vmatpush2.msra.mxu0 0.0
        %2392 = vmatprep.subr.mxu0 0.0
        %2393 = vmatpush2.msra.mxu0 0.0
        %2394 = vmatprep.subr.mxu0 0.0
        %2395 = vmatpush2.msra.mxu0 0.0
        %2396 = vmatprep.mubr.f32.mxu0 0.0
        %2397 = vmatmul.mubr.f32.gmra.mxu0 %v2259
        %v2398 = vpop.f32.mrf.mxu0
        %v2399 = vadd.f32 %v2255, %v2398
        %v2400 = vpop.f32.mrf.mxu0
        %v2401 = vadd.f32 %v2255, %v2400
        %2402 = vdwg.mxu0
        %v2403 = vtanh.pop %v2328
        %v2404 = vtanh.pop %v2330
        %v2405 = vtanh.pop %v2399
        %v2406 = vtanh.pop %v2401
        %v2411 = vcombine.low %v2403, %v2404
        %v2412 = vcombine.low %v2405, %v2406
        %2415 = vst [vmem:[%s394] sm:$0x77] %v2411
        %2416 = vst [vmem:[%s394 + $0x8] sm:$0x77] %v2412
        %s2417 = smul.u32 4, %s29
        %p2418 = scmp.lt.s32.totalorder %s28, 1
        %s2419 = scalar_select %p2418, %s28, 1
        %p2420 = scmp.lt.s32.totalorder %s2417, 3
        %s2421 = scalar_select %p2420, %s2417, 3
        %s2422 = smul.addr %s2419, 4
        %s2423 = sadd.s32 %s2421, %s2422
        %s2424 = smul.addr %s2423, 4
        %s2425 = scalar_lea.vmem %s9, %s2424
        // Predicated region
        $region65: #{tpu_custom_call.1} parent=55 // pred_check
          %p2426 = pneg %p252
        $region66: #{tpu_custom_call.1} parent=55 // pred_check_branch
          %2428 = sbr.rel (%p2426) target = $region68
        $region67: #{tpu_custom_call.1} parent=55 // pred_region
          %s2429 = smul.u32 4, %s29
        $region68: #{tpu_custom_call.1} parent=55 // pred_fallthru
          _
      $region56: #{tpu_custom_call.1} parent=5 // pred_fallthru
        _
      %p2430 = scmp.le.s32.totalorder 2, %s19
      // Predicated region
      $region69: #{tpu_custom_call.1} parent=5 // pred_check
        %p2431 = pneg %p2430
      $region70: #{tpu_custom_call.1} parent=5 // pred_check_branch
        %2433 = sbr.rel (%p2431) target = $region72
      $region71: #{tpu_custom_call.1} parent=5 // pred_region
        %s2434 = ssub.s32 %s19, 2
        // Predicated region
        $region73: #{tpu_custom_call.1} parent=71 // pred_check
          %p2435 = pneg %p258
        $region74: #{tpu_custom_call.1} parent=71 // pred_check_branch
          %2437 = sbr.rel (%p2435) target = $region76
        $region75: #{tpu_custom_call.1} parent=71 // pred_region
          %s2438 = smul.u32 4, %s31
          %p2439 = scmp.lt.s32.totalorder %s30, 1
          %s2440 = scalar_select %p2439, %s30, 1
          %p2441 = scmp.lt.s32.totalorder %s2438, 3
          %s2442 = scalar_select %p2441, %s2438, 3
          %s2443 = smul.addr %s2440, 4
          %s2444 = sadd.s32 %s2442, %s2443
          %s2445 = smul.addr %s2444, 4
          %s2446 = scalar_lea.vmem %s9, %s2445
        $region76: #{tpu_custom_call.1} parent=71 // pred_fallthru
          _
      $region72: #{tpu_custom_call.1} parent=5 // pred_fallthru
        _
    $region6: #{tpu_custom_call.1} parent=1 // loop_footer
      %s23 = sadd.s32 1, %s19
    $region7: #{tpu_custom_call.1} parent=1 // loop_footer_branch
      %18 = sbr.rel target = $region3
    $region8: #{tpu_custom_call.1} parent=1 // loop_exit
      _
    %2447 = vsyncpa [#allocation3], 1
    %s2448 = scalar_lea.sflag [#allocation3], 1
    %2449 = vsyncpa %s2448, 1
    %2450 = vsyncpa [#allocation5], 1

</llo_original>
